<compile_context>
chip_gen: v7x
topology: tpu7x:2x2x1
jax: 0.10.0
libtpu: 0.0.40
codegen_flags: <defaults>
</compile_context>

<pallas_src>
import jax
import jax.numpy as jnp
from jax.experimental import pallas as pl
from jax.experimental.pallas import tpu as pltpu


def ae_encoder_kernel(x_ref, w1_ref, b1_ref, w2_ref, b2_ref, w3_ref, b3_ref, o_ref):
    # Fused 3x (matmul + bias) with ReLU between layers.
    # Weights arrive pre-cast to bf16 (hoisted in the wrapper); activations are
    # cast per layer. Accumulation and the elementwise epilogue stay in f32.
    x = x_ref[...].astype(jnp.bfloat16)                                  # (TM, D_in)
    h1 = jnp.dot(x, w1_ref[...],
                 preferred_element_type=jnp.float32) + b1_ref[...]       # (TM, 64) f32
    h1 = jnp.maximum(h1, 0.0)
    h2 = jnp.dot(h1.astype(jnp.bfloat16), w2_ref[...],
                 preferred_element_type=jnp.float32) + b2_ref[...]       # (TM, 32) f32
    h2 = jnp.maximum(h2, 0.0)
    h3 = jnp.dot(h2.astype(jnp.bfloat16), w3_ref[...],
                 preferred_element_type=jnp.float32) + b3_ref[...]       # (TM, latent)
    # Lane-dense repack: (TM, latent) -> (TM//pack, pack*latent == 128) row-major.
    # The wrapper undoes it with a free row-major reshape. When the out block is
    # already (TM, latent) this reshape is the identity.
    o_ref[...] = h3.reshape(o_ref.shape).astype(o_ref.dtype)


def _round_up(n, m):
    return ((n + m - 1) // m) * m


def _choose_tiling(B, block_rows):
    """Pick (tm, b_pad) for the batch grid.

    * B <= 256: single grid step, pad only to a multiple of 16 (lane-dense repack).
    * B  > 256: >=2 grid steps (v7x megacore), tm a multiple of 128 so the
      lane-dense (tm//16, 128) out block satisfies the (8, 128) sublane rule.
      When B is a multiple of 128 no padding (and no jnp.pad copy) is needed.
    """
    if B <= 256:
        bp = _round_up(max(B, 16), 16)
        return bp, bp
    tm_target = min(block_rows, max(128, _round_up(pl.cdiv(B, 2), 128)))
    b_pad = _round_up(B, 128)
    tm = 128
    for cand in range(tm_target, 127, -128):
        if b_pad % cand == 0:
            tm = cand
            break
    return tm, b_pad


def _ae_encoder_impl(x, params, *, block_rows, lane_dense):
    w1, b1, w2, b2, w3, b3 = params
    B, d_in = x.shape
    h1_dim, h2_dim, latent = w1.shape[1], w2.shape[1], w3.shape[1]

    # Hoist the bf16 weight casts out of the kernel (one-time, tiny arrays).
    w1b, w2b, w3b = (w.astype(jnp.bfloat16) for w in (w1, w2, w3))

    tm, b_pad = _choose_tiling(B, block_rows)
    if b_pad != B:
        # TODO(synk): for very large ragged B, handle the tail with a second small
        # pallas_call instead of materializing a padded copy of x in HBM.
        x = jnp.pad(x, ((0, b_pad - B), (0, 0)))
    grid = (b_pad // tm,)

    # Lane-dense output repack factor (same HBM bytes, dense 128-lane stores).
    pack = 1
    if lane_dense and latent < 128 and 128 % latent == 0 and tm % (128 // latent) == 0:
        pack = 128 // latent
    out_rows, out_cols = b_pad // pack, pack * latent
    blk_rows = tm // pack

    resident = lambda i: (0, 0)   # weights/biases: same block every step -> stay in VMEM

    flops = 2 * b_pad * (d_in * h1_dim + h1_dim * h2_dim + h2_dim * latent)
    bytes_accessed = (b_pad * d_in * x.dtype.itemsize
                      + b_pad * latent * 4
                      + sum(int(p.size) * p.dtype.itemsize
                            for p in (w1b, b1, w2b, b2, w3b, b3)))

    out = pl.pallas_call(
        ae_encoder_kernel,
        out_shape=jax.ShapeDtypeStruct((out_rows, out_cols), jnp.float32),
        grid=grid,
        in_specs=[
            pl.BlockSpec((tm, d_in), lambda i: (i, 0)),   # x: tiled over batch
            pl.BlockSpec(w1b.shape, resident),
            pl.BlockSpec(b1.shape, resident),
            pl.BlockSpec(w2b.shape, resident),
            pl.BlockSpec(b2.shape, resident),
            pl.BlockSpec(w3b.shape, resident),
            pl.BlockSpec(b3.shape, resident),
        ],
        out_specs=pl.BlockSpec((blk_rows, out_cols), lambda i: (i, 0)),
        compiler_params=pltpu.CompilerParams(
            dimension_semantics=("parallel",),            # megacore split on v7x
            vmem_limit_bytes=32 * 1024 * 1024,            # << 64 MiB v7x physical VMEM
        ),
        cost_estimate=pl.CostEstimate(
            flops=flops, transcendentals=0, bytes_accessed=bytes_accessed),
    )(x, w1b, b1, w2b, b2, w3b, b3)

    out = out.reshape(b_pad, latent)                      # free row-major un-pack
    return out[:B] if b_pad != B else out


def ae_encoder(x, params, *, block_rows=4096):
    """Fused encoder forward pass as a single batch-tiled Pallas kernel."""
    try:
        return _ae_encoder_impl(x, params, block_rows=block_rows, lane_dense=True)
    except Exception:
        # Lane-dense repack relies on an in-kernel sublane->lane reshape; if this
        # Mosaic version rejects it, fall back to the narrow (tm, latent) out block.
        return _ae_encoder_impl(x, params, block_rows=block_rows, lane_dense=False)


def init_ae_params(key, input_dim, latent_dim):
    """Deterministic init matching PyTorch nn.Linear default U[-1/sqrt(fan_in), +1/sqrt(fan_in)].

    Weights stored as (in_features, out_features); biases as (1, out_features)
    so they broadcast over the batch dim inside the kernel. y = x @ W + b is
    mathematically identical to PyTorch's y = x @ W_pt.T + b.
    """
    dims = [(input_dim, 64), (64, 32), (32, latent_dim)]
    params = []
    for (fan_in, fan_out) in dims:
        key, kw, kb = jax.random.split(key, 3)
        bound = 1.0 / jnp.sqrt(float(fan_in))
        w = jax.random.uniform(kw, (fan_in, fan_out), jnp.float32, -bound, bound)
        b = jax.random.uniform(kb, (1, fan_out), jnp.float32, -bound, bound)
        params.extend([w, b])
    return tuple(params)


def ae_encoder_ref_f32(x, params):
    """Pure-f32 JAX reference (mirrors the PyTorch module exactly)."""
    w1, b1, w2, b2, w3, b3 = params
    h = jnp.maximum(x @ w1 + b1, 0.0)
    h = jnp.maximum(h @ w2 + b2, 0.0)
    return h @ w3 + b3


def ae_encoder_ref_bf16(x, params):
    """Reference with the same bf16-operand / f32-accumulate numerics as the kernel."""
    w1, b1, w2, b2, w3, b3 = params
    bf = jnp.bfloat16
    h = jnp.maximum(jnp.dot(x.astype(bf), w1.astype(bf),
                            preferred_element_type=jnp.float32) + b1, 0.0)
    h = jnp.maximum(jnp.dot(h.astype(bf), w2.astype(bf),
                            preferred_element_type=jnp.float32) + b2, 0.0)
    return jnp.dot(h.astype(bf), w3.astype(bf),
                   preferred_element_type=jnp.float32) + b3


if __name__ == "__main__":
    input_dim = 16
    latent_dim = 8
    batch = 1024            # exercises the batch grid: 2 tiles of 512 rows

    key = jax.random.PRNGKey(0)
    key, kx = jax.random.split(key)
    x = jax.random.normal(kx, (batch, input_dim), jnp.float32)
    params = init_ae_params(key, input_dim, latent_dim)

    out = jax.block_until_ready(ae_encoder(x, params))
    assert out.shape == (batch, latent_dim)

    # Tight check vs a reference using identical bf16-operand numerics.
    ref_bf16 = ae_encoder_ref_bf16(x, params)
    assert jnp.allclose(out, ref_bf16, atol=1e-3, rtol=1e-3), "mismatch vs bf16 reference"

    # Loose check vs the exact f32 PyTorch-equivalent math (bf16 operand rounding only).
    ref_f32 = ae_encoder_ref_f32(x, params)
    assert jnp.allclose(out, ref_f32, atol=5e-2, rtol=5e-2), "mismatch vs f32 reference"

    # Small, ragged batch exercises the single-step / padded path.
    x_small = x[:50]
    out_small = jax.block_until_ready(ae_encoder(x_small, params))
    assert out_small.shape == (50, latent_dim)
    assert jnp.allclose(out_small, ae_encoder_ref_bf16(x_small, params),
                        atol=1e-3, rtol=1e-3), "mismatch on small batch"

    print("KERNEL_OK")
</pallas_src>

<mosaic_0001>
module attributes {stable_mosaic.version = 11 : i64} {
  func.func @ae_encoder_kernel(%arg0: i32, %arg1: memref<512x16xf32, #tpu.memory_space<vmem>>, %arg2: memref<16x64xbf16, #tpu.memory_space<vmem>>, %arg3: memref<1x64xf32, #tpu.memory_space<vmem>>, %arg4: memref<64x32xbf16, #tpu.memory_space<vmem>>, %arg5: memref<1x32xf32, #tpu.memory_space<vmem>>, %arg6: memref<32x8xbf16, #tpu.memory_space<vmem>>, %arg7: memref<1x8xf32, #tpu.memory_space<vmem>>, %arg8: memref<32x128xf32, #tpu.memory_space<vmem>>) attributes {dimension_semantics = [#tpu.dimension_semantics<parallel>], iteration_bounds = array<i64: 2>, scalar_prefetch = 0 : i64, scratch_operands = 0 : i64, tpu.core_type = #tpu.core_type<tc>, window_params = [{transform_indices = @transform_0, window_bounds = array<i64: 512, 16>}, {pipeline_mode = #tpu.pipeline_mode<synchronous>, transform_indices = @transform_1, window_bounds = array<i64: 16, 64>}, {pipeline_mode = #tpu.pipeline_mode<synchronous>, transform_indices = @transform_2, window_bounds = array<i64: 1, 64>}, {pipeline_mode = #tpu.pipeline_mode<synchronous>, transform_indices = @transform_3, window_bounds = array<i64: 64, 32>}, {pipeline_mode = #tpu.pipeline_mode<synchronous>, transform_indices = @transform_4, window_bounds = array<i64: 1, 32>}, {pipeline_mode = #tpu.pipeline_mode<synchronous>, transform_indices = @transform_5, window_bounds = array<i64: 32, 8>}, {pipeline_mode = #tpu.pipeline_mode<synchronous>, transform_indices = @transform_6, window_bounds = array<i64: 1, 8>}, {transform_indices = @transform_7, window_bounds = array<i64: 32, 128>}]} {
    %c0 = arith.constant 0 : index
    %c0_0 = arith.constant 0 : index
    %0 = vector.load %arg1[%c0, %c0_0] : memref<512x16xf32, #tpu.memory_space<vmem>>, vector<512x16xf32>
    %1 = arith.truncf %0 : vector<512x16xf32> to vector<512x16xbf16>
    %c0_1 = arith.constant 0 : index
    %c0_2 = arith.constant 0 : index
    %2 = vector.load %arg2[%c0_1, %c0_2] : memref<16x64xbf16, #tpu.memory_space<vmem>>, vector<16x64xbf16>
    %cst = arith.constant dense<0.000000e+00> : vector<512x64xf32>
    %3 = tpu.matmul %1, %2, %cst {dimension_numbers = #tpu.dot_dimension_numbers<[1], [0], [0], [1], [0, 0, 1, 1], [], []>} : vector<512x16xbf16>, vector<16x64xbf16>, vector<512x64xf32> -> vector<512x64xf32>
    %c0_3 = arith.constant 0 : index
    %c0_4 = arith.constant 0 : index
    %4 = vector.load %arg3[%c0_3, %c0_4] : memref<1x64xf32, #tpu.memory_space<vmem>>, vector<1x64xf32>
    %5 = vector.broadcast %4 : vector<1x64xf32> to vector<512x64xf32>
    %6 = arith.addf %3, %5 : vector<512x64xf32>
    %cst_5 = arith.constant 0.000000e+00 : f32
    %7 = vector.broadcast %cst_5 : f32 to vector<512x64xf32>
    %8 = arith.maximumf %6, %7 : vector<512x64xf32>
    %9 = arith.truncf %8 : vector<512x64xf32> to vector<512x64xbf16>
    %c0_6 = arith.constant 0 : index
    %c0_7 = arith.constant 0 : index
    %10 = vector.load %arg4[%c0_6, %c0_7] : memref<64x32xbf16, #tpu.memory_space<vmem>>, vector<64x32xbf16>
    %cst_8 = arith.constant dense<0.000000e+00> : vector<512x32xf32>
    %11 = tpu.matmul %9, %10, %cst_8 {dimension_numbers = #tpu.dot_dimension_numbers<[1], [0], [0], [1], [0, 0, 1, 1], [], []>} : vector<512x64xbf16>, vector<64x32xbf16>, vector<512x32xf32> -> vector<512x32xf32>
    %c0_9 = arith.constant 0 : index
    %c0_10 = arith.constant 0 : index
    %12 = vector.load %arg5[%c0_9, %c0_10] : memref<1x32xf32, #tpu.memory_space<vmem>>, vector<1x32xf32>
    %13 = vector.broadcast %12 : vector<1x32xf32> to vector<512x32xf32>
    %14 = arith.addf %11, %13 : vector<512x32xf32>
    %cst_11 = arith.constant 0.000000e+00 : f32
    %15 = vector.broadcast %cst_11 : f32 to vector<512x32xf32>
    %16 = arith.maximumf %14, %15 : vector<512x32xf32>
    %17 = arith.truncf %16 : vector<512x32xf32> to vector<512x32xbf16>
    %c0_12 = arith.constant 0 : index
    %c0_13 = arith.constant 0 : index
    %18 = vector.load %arg6[%c0_12, %c0_13] : memref<32x8xbf16, #tpu.memory_space<vmem>>, vector<32x8xbf16>
    %cst_14 = arith.constant dense<0.000000e+00> : vector<512x8xf32>
    %19 = tpu.matmul %17, %18, %cst_14 {dimension_numbers = #tpu.dot_dimension_numbers<[1], [0], [0], [1], [0, 0, 1, 1], [], []>} : vector<512x32xbf16>, vector<32x8xbf16>, vector<512x8xf32> -> vector<512x8xf32>
    %c0_15 = arith.constant 0 : index
    %c0_16 = arith.constant 0 : index
    %20 = vector.load %arg7[%c0_15, %c0_16] : memref<1x8xf32, #tpu.memory_space<vmem>>, vector<1x8xf32>
    %21 = vector.broadcast %20 : vector<1x8xf32> to vector<512x8xf32>
    %22 = arith.addf %19, %21 : vector<512x8xf32>
    %23 = vector.shape_cast %22 : vector<512x8xf32> to vector<32x128xf32>
    %c0_17 = arith.constant 0 : index
    %c0_18 = arith.constant 0 : index
    %24 = vector.load %arg8[%c0_17, %c0_18] : memref<32x128xf32, #tpu.memory_space<vmem>>, vector<32x128xf32>
    tpu.vector_store %arg8[%c0_17, %c0_18], %23 {strides = array<i32>} : memref<32x128xf32, #tpu.memory_space<vmem>>, vector<32x128xf32>,
    return
  }
  func.func @transform_0(%arg0: i32) -> (i32, i32) {
    %c0_i32 = arith.constant 0 : i32
    %c0_i32_0 = arith.constant 0 : i32
    return %arg0, %c0_i32 : i32, i32
  }
  func.func @transform_1(%arg0: i32) -> (i32, i32) {
    %c0_i32 = arith.constant 0 : i32
    %c0_i32_0 = arith.constant 0 : i32
    %c0_i32_1 = arith.constant 0 : i32
    return %c0_i32, %c0_i32_0 : i32, i32
  }
  func.func @transform_2(%arg0: i32) -> (i32, i32) {
    %c0_i32 = arith.constant 0 : i32
    %c0_i32_0 = arith.constant 0 : i32
    %c0_i32_1 = arith.constant 0 : i32
    return %c0_i32, %c0_i32_0 : i32, i32
  }
  func.func @transform_3(%arg0: i32) -> (i32, i32) {
    %c0_i32 = arith.constant 0 : i32
    %c0_i32_0 = arith.constant 0 : i32
    %c0_i32_1 = arith.constant 0 : i32
    return %c0_i32, %c0_i32_0 : i32, i32
  }
  func.func @transform_4(%arg0: i32) -> (i32, i32) {
    %c0_i32 = arith.constant 0 : i32
    %c0_i32_0 = arith.constant 0 : i32
    %c0_i32_1 = arith.constant 0 : i32
    return %c0_i32, %c0_i32_0 : i32, i32
  }
  func.func @transform_5(%arg0: i32) -> (i32, i32) {
    %c0_i32 = arith.constant 0 : i32
    %c0_i32_0 = arith.constant 0 : i32
    %c0_i32_1 = arith.constant 0 : i32
    return %c0_i32, %c0_i32_0 : i32, i32
  }
  func.func @transform_6(%arg0: i32) -> (i32, i32) {
    %c0_i32 = arith.constant 0 : i32
    %c0_i32_0 = arith.constant 0 : i32
    %c0_i32_1 = arith.constant 0 : i32
    return %c0_i32, %c0_i32_0 : i32, i32
  }
  func.func @transform_7(%arg0: i32) -> (i32, i32) {
    %c0_i32 = arith.constant 0 : i32
    %c0_i32_0 = arith.constant 0 : i32
    return %arg0, %c0_i32 : i32, i32
  }
}

module attributes {stable_mosaic.version = 11 : i64} {
  func.func @ae_encoder_kernel(%arg0: i32, %arg1: memref<512x16xf32, #tpu.memory_space<vmem>>, %arg2: memref<16x64xbf16, #tpu.memory_space<vmem>>, %arg3: memref<1x64xf32, #tpu.memory_space<vmem>>, %arg4: memref<64x32xbf16, #tpu.memory_space<vmem>>, %arg5: memref<1x32xf32, #tpu.memory_space<vmem>>, %arg6: memref<32x8xbf16, #tpu.memory_space<vmem>>, %arg7: memref<1x8xf32, #tpu.memory_space<vmem>>, %arg8: memref<512x8xf32, #tpu.memory_space<vmem>>) attributes {dimension_semantics = [#tpu.dimension_semantics<parallel>], iteration_bounds = array<i64: 2>, scalar_prefetch = 0 : i64, scratch_operands = 0 : i64, tpu.core_type = #tpu.core_type<tc>, window_params = [{transform_indices = @transform_0, window_bounds = array<i64: 512, 16>}, {pipeline_mode = #tpu.pipeline_mode<synchronous>, transform_indices = @transform_1, window_bounds = array<i64: 16, 64>}, {pipeline_mode = #tpu.pipeline_mode<synchronous>, transform_indices = @transform_2, window_bounds = array<i64: 1, 64>}, {pipeline_mode = #tpu.pipeline_mode<synchronous>, transform_indices = @transform_3, window_bounds = array<i64: 64, 32>}, {pipeline_mode = #tpu.pipeline_mode<synchronous>, transform_indices = @transform_4, window_bounds = array<i64: 1, 32>}, {pipeline_mode = #tpu.pipeline_mode<synchronous>, transform_indices = @transform_5, window_bounds = array<i64: 32, 8>}, {pipeline_mode = #tpu.pipeline_mode<synchronous>, transform_indices = @transform_6, window_bounds = array<i64: 1, 8>}, {transform_indices = @transform_7, window_bounds = array<i64: 512, 8>}]} {
    %c0 = arith.constant 0 : index
    %c0_0 = arith.constant 0 : index
    %0 = vector.load %arg1[%c0, %c0_0] : memref<512x16xf32, #tpu.memory_space<vmem>>, vector<512x16xf32>
    %1 = arith.truncf %0 : vector<512x16xf32> to vector<512x16xbf16>
    %c0_1 = arith.constant 0 : index
    %c0_2 = arith.constant 0 : index
    %2 = vector.load %arg2[%c0_1, %c0_2] : memref<16x64xbf16, #tpu.memory_space<vmem>>, vector<16x64xbf16>
    %cst = arith.constant dense<0.000000e+00> : vector<512x64xf32>
    %3 = tpu.matmul %1, %2, %cst {dimension_numbers = #tpu.dot_dimension_numbers<[1], [0], [0], [1], [0, 0, 1, 1], [], []>} : vector<512x16xbf16>, vector<16x64xbf16>, vector<512x64xf32> -> vector<512x64xf32>
    %c0_3 = arith.constant 0 : index
    %c0_4 = arith.constant 0 : index
    %4 = vector.load %arg3[%c0_3, %c0_4] : memref<1x64xf32, #tpu.memory_space<vmem>>, vector<1x64xf32>
    %5 = vector.broadcast %4 : vector<1x64xf32> to vector<512x64xf32>
    %6 = arith.addf %3, %5 : vector<512x64xf32>
    %cst_5 = arith.constant 0.000000e+00 : f32
    %7 = vector.broadcast %cst_5 : f32 to vector<512x64xf32>
    %8 = arith.maximumf %6, %7 : vector<512x64xf32>
    %9 = arith.truncf %8 : vector<512x64xf32> to vector<512x64xbf16>
    %c0_6 = arith.constant 0 : index
    %c0_7 = arith.constant 0 : index
    %10 = vector.load %arg4[%c0_6, %c0_7] : memref<64x32xbf16, #tpu.memory_space<vmem>>, vector<64x32xbf16>
    %cst_8 = arith.constant dense<0.000000e+00> : vector<512x32xf32>
    %11 = tpu.matmul %9, %10, %cst_8 {dimension_numbers = #tpu.dot_dimension_numbers<[1], [0], [0], [1], [0, 0, 1, 1], [], []>} : vector<512x64xbf16>, vector<64x32xbf16>, vector<512x32xf32> -> vector<512x32xf32>
    %c0_9 = arith.constant 0 : index
    %c0_10 = arith.constant 0 : index
    %12 = vector.load %arg5[%c0_9, %c0_10] : memref<1x32xf32, #tpu.memory_space<vmem>>, vector<1x32xf32>
    %13 = vector.broadcast %12 : vector<1x32xf32> to vector<512x32xf32>
    %14 = arith.addf %11, %13 : vector<512x32xf32>
    %cst_11 = arith.constant 0.000000e+00 : f32
    %15 = vector.broadcast %cst_11 : f32 to vector<512x32xf32>
    %16 = arith.maximumf %14, %15 : vector<512x32xf32>
    %17 = arith.truncf %16 : vector<512x32xf32> to vector<512x32xbf16>
    %c0_12 = arith.constant 0 : index
    %c0_13 = arith.constant 0 : index
    %18 = vector.load %arg6[%c0_12, %c0_13] : memref<32x8xbf16, #tpu.memory_space<vmem>>, vector<32x8xbf16>
    %cst_14 = arith.constant dense<0.000000e+00> : vector<512x8xf32>
    %19 = tpu.matmul %17, %18, %cst_14 {dimension_numbers = #tpu.dot_dimension_numbers<[1], [0], [0], [1], [0, 0, 1, 1], [], []>} : vector<512x32xbf16>, vector<32x8xbf16>, vector<512x8xf32> -> vector<512x8xf32>
    %c0_15 = arith.constant 0 : index
    %c0_16 = arith.constant 0 : index
    %20 = vector.load %arg7[%c0_15, %c0_16] : memref<1x8xf32, #tpu.memory_space<vmem>>, vector<1x8xf32>
    %21 = vector.broadcast %20 : vector<1x8xf32> to vector<512x8xf32>
    %22 = arith.addf %19, %21 : vector<512x8xf32>
    %c0_17 = arith.constant 0 : index
    %c0_18 = arith.constant 0 : index
    %23 = vector.load %arg8[%c0_17, %c0_18] : memref<512x8xf32, #tpu.memory_space<vmem>>, vector<512x8xf32>
    tpu.vector_store %arg8[%c0_17, %c0_18], %22 {strides = array<i32>} : memref<512x8xf32, #tpu.memory_space<vmem>>, vector<512x8xf32>,
    return
  }
  func.func @transform_0(%arg0: i32) -> (i32, i32) {
    %c0_i32 = arith.constant 0 : i32
    %c0_i32_0 = arith.constant 0 : i32
    return %arg0, %c0_i32 : i32, i32
  }
  func.func @transform_1(%arg0: i32) -> (i32, i32) {
    %c0_i32 = arith.constant 0 : i32
    %c0_i32_0 = arith.constant 0 : i32
    %c0_i32_1 = arith.constant 0 : i32
    return %c0_i32, %c0_i32_0 : i32, i32
  }
  func.func @transform_2(%arg0: i32) -> (i32, i32) {
    %c0_i32 = arith.constant 0 : i32
    %c0_i32_0 = arith.constant 0 : i32
    %c0_i32_1 = arith.constant 0 : i32
    return %c0_i32, %c0_i32_0 : i32, i32
  }
  func.func @transform_3(%arg0: i32) -> (i32, i32) {
    %c0_i32 = arith.constant 0 : i32
    %c0_i32_0 = arith.constant 0 : i32
    %c0_i32_1 = arith.constant 0 : i32
    return %c0_i32, %c0_i32_0 : i32, i32
  }
  func.func @transform_4(%arg0: i32) -> (i32, i32) {
    %c0_i32 = arith.constant 0 : i32
    %c0_i32_0 = arith.constant 0 : i32
    %c0_i32_1 = arith.constant 0 : i32
    return %c0_i32, %c0_i32_0 : i32, i32
  }
  func.func @transform_5(%arg0: i32) -> (i32, i32) {
    %c0_i32 = arith.constant 0 : i32
    %c0_i32_0 = arith.constant 0 : i32
    %c0_i32_1 = arith.constant 0 : i32
    return %c0_i32, %c0_i32_0 : i32, i32
  }
  func.func @transform_6(%arg0: i32) -> (i32, i32) {
    %c0_i32 = arith.constant 0 : i32
    %c0_i32_0 = arith.constant 0 : i32
    %c0_i32_1 = arith.constant 0 : i32
    return %c0_i32, %c0_i32_0 : i32, i32
  }
  func.func @transform_7(%arg0: i32) -> (i32, i32) {
    %c0_i32 = arith.constant 0 : i32
    %c0_i32_0 = arith.constant 0 : i32
    return %arg0, %c0_i32 : i32, i32
  }
}

</mosaic_0001>

<llo_original>
// kernel: tpu_custom_call.1
$region0: #{tpu_custom_call.1}
  #allocation0 [shape = 'u32[]', space=smem, size = 0x4, offset = 0x4, fixed_abs, tag = 'smem constant byte address 0x4 - core index']
  #allocation1 [shape = 'u32[144,128]{1,0:T(1,128)}', space=vmem, size = 0x12000, scoped, tag = 'internal scratch']
  %s0 = inlined_call_operand.vmem [shape: f32[1024,16], index: 0, kind: input, shape index: {}]
  %s1 = inlined_call_operand.vmem [shape: bf16[16,64], index: 1, kind: input, shape index: {}]
  %s2 = inlined_call_operand.vmem [shape: f32[1,64], index: 2, kind: input, shape index: {}]
  %s3 = inlined_call_operand.vmem [shape: bf16[64,32], index: 3, kind: input, shape index: {}]
  %s4 = inlined_call_operand.vmem [shape: f32[1,32], index: 4, kind: input, shape index: {}]
  %s5 = inlined_call_operand.vmem [shape: bf16[32,8], index: 5, kind: input, shape index: {}]
  %s6 = inlined_call_operand.vmem [shape: f32[1,8], index: 6, kind: input, shape index: {}]
  %s7 = inlined_call_operand.vmem [shape: f32[1024,8], index: 7, kind: output, shape index: {}]
  %s8 = sld [smem:[#allocation0]]
  $region61: #{tpu_custom_call.1} parent=0
    _
  %s10 = ssub.s32 1, %s8
  %s11 = scalar_select 0, %s10, %s8
  loop: start=0, step=1, limit=4
  $region2: #{tpu_custom_call.1} parent=0 // loop_pre_header
    _
  $region3: #{tpu_custom_call.1} parent=0 // loop_header
    %s13 = sphi 0, %s17
    %p14 = scmp.ge.s32.totalorder %s13, 4
    %s23 = sphi 0, %s25
    %s26 = sphi 0, %s23
    %s27 = sphi 0, %s26
    %s43 = sphi 0, %s27
    %s47 = sphi 0, %s47
    %s49 = sphi 0, %s47
    %s50 = sphi 0, %s49
    %s64 = sphi 0, %s50
    %s68 = sphi 0, %s68
    %s70 = sphi 0, %s68
    %s71 = sphi 0, %s70
    %s85 = sphi 0, %s71
    %s89 = sphi 0, %s89
    %s91 = sphi 0, %s89
    %s92 = sphi 0, %s91
    %s106 = sphi 0, %s92
    %s110 = sphi 0, %s110
    %s112 = sphi 0, %s110
    %s113 = sphi 0, %s112
    %s127 = sphi 0, %s113
    %s131 = sphi 0, %s131
    %s133 = sphi 0, %s131
    %s134 = sphi 0, %s133
    %s148 = sphi 0, %s134
    %s152 = sphi 0, %s152
    %s154 = sphi 0, %s152
    %s155 = sphi 0, %s154
    %s169 = sphi 0, %s155
    %s175 = sphi 0, %s177
    %s178 = sphi 0, %s175
    %s179 = sphi 0, %s178
    %s195 = sphi 0, %s179
  $region4: #{tpu_custom_call.1} parent=0 // loop_header_branch
    %16 = sbr.rel (%p14) target = $region8
  $region5: #{tpu_custom_call.1} parent=0 // loop_body
    %s18 = ssub.s32 %s13, 1
    %s19 = ssub.s32 %s13, 2
    %s20 = sadd.s32 %s13, 1
    %s21 = ssub.s32 %s13, %s20
    %p22 = scmp.eq.s32.totalorder %s21, 0
    %s24 = sadd.s32 %s23, 1
    %s25 = scalar_select %p22, %s23, %s24
    %p28 = pneg %p22
    %p29 = scmp.eq.s32.totalorder %s13, 1
    %p30 = por %p28, %p29
    %p31 = scmp.ne.s32.totalorder %s23, %s26
    %p32 = scmp.eq.s32.totalorder %s13, 0
    %p33 = por %p31, %p32
    %p34 = scmp.ne.s32.totalorder %s23, %s26
    %p35 = scmp.eq.s32.totalorder %s18, 1
    %p36 = por %p34, %p35
    %p37 = scmp.ne.s32.totalorder %s26, %s27
    %p38 = scmp.eq.s32.totalorder %s18, 0
    %p39 = por %p37, %p38
    %p40 = scmp.ne.s32.totalorder %s26, %s27
    %p41 = scmp.eq.s32.totalorder %s19, 1
    %p42 = por %p40, %p41
    %p44 = scmp.ne.s32.totalorder %s27, %s43
    %p45 = scmp.eq.s32.totalorder %s19, 0
    %p46 = por %p44, %p45
    %s48 = sadd.s32 %s47, 1
    %p51 = scmp.eq.s32.totalorder %s13, 1
    %p52 = scmp.ne.s32.totalorder %s47, %s49
    %p53 = scmp.eq.s32.totalorder %s13, 0
    %p54 = por %p52, %p53
    %p55 = scmp.ne.s32.totalorder %s47, %s49
    %p56 = scmp.eq.s32.totalorder %s18, 1
    %p57 = por %p55, %p56
    %p58 = scmp.ne.s32.totalorder %s49, %s50
    %p59 = scmp.eq.s32.totalorder %s18, 0
    %p60 = por %p58, %p59
    %p61 = scmp.ne.s32.totalorder %s49, %s50
    %p62 = scmp.eq.s32.totalorder %s19, 1
    %p63 = por %p61, %p62
    %p65 = scmp.ne.s32.totalorder %s50, %s64
    %p66 = scmp.eq.s32.totalorder %s19, 0
    %p67 = por %p65, %p66
    %s69 = sadd.s32 %s68, 1
    %p72 = scmp.eq.s32.totalorder %s13, 1
    %p73 = scmp.ne.s32.totalorder %s68, %s70
    %p74 = scmp.eq.s32.totalorder %s13, 0
    %p75 = por %p73, %p74
    %p76 = scmp.ne.s32.totalorder %s68, %s70
    %p77 = scmp.eq.s32.totalorder %s18, 1
    %p78 = por %p76, %p77
    %p79 = scmp.ne.s32.totalorder %s70, %s71
    %p80 = scmp.eq.s32.totalorder %s18, 0
    %p81 = por %p79, %p80
    %p82 = scmp.ne.s32.totalorder %s70, %s71
    %p83 = scmp.eq.s32.totalorder %s19, 1
    %p84 = por %p82, %p83
    %p86 = scmp.ne.s32.totalorder %s71, %s85
    %p87 = scmp.eq.s32.totalorder %s19, 0
    %p88 = por %p86, %p87
    %s90 = sadd.s32 %s89, 1
    %p93 = scmp.eq.s32.totalorder %s13, 1
    %p94 = scmp.ne.s32.totalorder %s89, %s91
    %p95 = scmp.eq.s32.totalorder %s13, 0
    %p96 = por %p94, %p95
    %p97 = scmp.ne.s32.totalorder %s89, %s91
    %p98 = scmp.eq.s32.totalorder %s18, 1
    %p99 = por %p97, %p98
    %p100 = scmp.ne.s32.totalorder %s91, %s92
    %p101 = scmp.eq.s32.totalorder %s18, 0
    %p102 = por %p100, %p101
    %p103 = scmp.ne.s32.totalorder %s91, %s92
    %p104 = scmp.eq.s32.totalorder %s19, 1
    %p105 = por %p103, %p104
    %p107 = scmp.ne.s32.totalorder %s92, %s106
    %p108 = scmp.eq.s32.totalorder %s19, 0
    %p109 = por %p107, %p108
    %s111 = sadd.s32 %s110, 1
    %p114 = scmp.eq.s32.totalorder %s13, 1
    %p115 = scmp.ne.s32.totalorder %s110, %s112
    %p116 = scmp.eq.s32.totalorder %s13, 0
    %p117 = por %p115, %p116
    %p118 = scmp.ne.s32.totalorder %s110, %s112
    %p119 = scmp.eq.s32.totalorder %s18, 1
    %p120 = por %p118, %p119
    %p121 = scmp.ne.s32.totalorder %s112, %s113
    %p122 = scmp.eq.s32.totalorder %s18, 0
    %p123 = por %p121, %p122
    %p124 = scmp.ne.s32.totalorder %s112, %s113
    %p125 = scmp.eq.s32.totalorder %s19, 1
    %p126 = por %p124, %p125
    %p128 = scmp.ne.s32.totalorder %s113, %s127
    %p129 = scmp.eq.s32.totalorder %s19, 0
    %p130 = por %p128, %p129
    %s132 = sadd.s32 %s131, 1
    %p135 = scmp.eq.s32.totalorder %s13, 1
    %p136 = scmp.ne.s32.totalorder %s131, %s133
    %p137 = scmp.eq.s32.totalorder %s13, 0
    %p138 = por %p136, %p137
    %p139 = scmp.ne.s32.totalorder %s131, %s133
    %p140 = scmp.eq.s32.totalorder %s18, 1
    %p141 = por %p139, %p140
    %p142 = scmp.ne.s32.totalorder %s133, %s134
    %p143 = scmp.eq.s32.totalorder %s18, 0
    %p144 = por %p142, %p143
    %p145 = scmp.ne.s32.totalorder %s133, %s134
    %p146 = scmp.eq.s32.totalorder %s19, 1
    %p147 = por %p145, %p146
    %p149 = scmp.ne.s32.totalorder %s134, %s148
    %p150 = scmp.eq.s32.totalorder %s19, 0
    %p151 = por %p149, %p150
    %s153 = sadd.s32 %s152, 1
    %p156 = scmp.eq.s32.totalorder %s13, 1
    %p157 = scmp.ne.s32.totalorder %s152, %s154
    %p158 = scmp.eq.s32.totalorder %s13, 0
    %p159 = por %p157, %p158
    %p160 = scmp.ne.s32.totalorder %s152, %s154
    %p161 = scmp.eq.s32.totalorder %s18, 1
    %p162 = por %p160, %p161
    %p163 = scmp.ne.s32.totalorder %s154, %s155
    %p164 = scmp.eq.s32.totalorder %s18, 0
    %p165 = por %p163, %p164
    %p166 = scmp.ne.s32.totalorder %s154, %s155
    %p167 = scmp.eq.s32.totalorder %s19, 1
    %p168 = por %p166, %p167
    %p170 = scmp.ne.s32.totalorder %s155, %s169
    %p171 = scmp.eq.s32.totalorder %s19, 0
    %p172 = por %p170, %p171
    %s173 = ssub.s32 %s13, %s20
    %p174 = scmp.eq.s32.totalorder %s173, 0
    %s176 = sadd.s32 %s175, 1
    %s177 = scalar_select %p174, %s175, %s176
    %p180 = pneg %p174
    %p181 = scmp.eq.s32.totalorder %s13, 1
    %p182 = por %p180, %p181
    %p183 = scmp.ne.s32.totalorder %s175, %s178
    %p184 = scmp.eq.s32.totalorder %s13, 0
    %p185 = por %p183, %p184
    %p186 = scmp.ne.s32.totalorder %s175, %s178
    %p187 = scmp.eq.s32.totalorder %s18, 1
    %p188 = por %p186, %p187
    %p189 = scmp.ne.s32.totalorder %s178, %s179
    %p190 = scmp.eq.s32.totalorder %s18, 0
    %p191 = por %p189, %p190
    %p192 = scmp.ne.s32.totalorder %s178, %s179
    %p193 = scmp.eq.s32.totalorder %s19, 1
    %p194 = por %p192, %p193
    %p196 = scmp.ne.s32.totalorder %s179, %s195
    %p197 = scmp.eq.s32.totalorder %s19, 0
    %p198 = por %p196, %p197
    %p199 = scmp.le.s32.totalorder 1, %s13
    %p200 = scmp.lt.s32.totalorder %s13, 3
    %p201 = pnand %p199, %p200
    %p202 = pneg %p201
    // Predicated region
    $region9: #{tpu_custom_call.1} parent=5 // pred_check
      _
    $region10: #{tpu_custom_call.1} parent=5 // pred_check_branch
      %204 = sbr.rel (%p201) target = $region12
    $region11: #{tpu_custom_call.1} parent=5 // pred_region
      %s205 = ssub.s32 %s13, 1
      // Predicated region
      $region13: #{tpu_custom_call.1} parent=11 // pred_check
        %p206 = pneg %p60
      $region14: #{tpu_custom_call.1} parent=11 // pred_check_branch
        %208 = sbr.rel (%p206) target = $region16
      $region15: #{tpu_custom_call.1} parent=11 // pred_region
        _
      $region16: #{tpu_custom_call.1} parent=11 // pred_fallthru
        _
      // Predicated region
      $region17: #{tpu_custom_call.1} parent=11 // pred_check
        %p209 = pneg %p81
      $region18: #{tpu_custom_call.1} parent=11 // pred_check_branch
        %211 = sbr.rel (%p209) target = $region20
      $region19: #{tpu_custom_call.1} parent=11 // pred_region
        _
      $region20: #{tpu_custom_call.1} parent=11 // pred_fallthru
        _
      // Predicated region
      $region21: #{tpu_custom_call.1} parent=11 // pred_check
        %p212 = pneg %p102
      $region22: #{tpu_custom_call.1} parent=11 // pred_check_branch
        %214 = sbr.rel (%p212) target = $region24
      $region23: #{tpu_custom_call.1} parent=11 // pred_region
        _
      $region24: #{tpu_custom_call.1} parent=11 // pred_fallthru
        _
      // Predicated region
      $region25: #{tpu_custom_call.1} parent=11 // pred_check
        %p215 = pneg %p123
      $region26: #{tpu_custom_call.1} parent=11 // pred_check_branch
        %217 = sbr.rel (%p215) target = $region28
      $region27: #{tpu_custom_call.1} parent=11 // pred_region
        _
      $region28: #{tpu_custom_call.1} parent=11 // pred_fallthru
        _
      // Predicated region
      $region29: #{tpu_custom_call.1} parent=11 // pred_check
        %p218 = pneg %p144
      $region30: #{tpu_custom_call.1} parent=11 // pred_check_branch
        %220 = sbr.rel (%p218) target = $region32
      $region31: #{tpu_custom_call.1} parent=11 // pred_region
        _
      $region32: #{tpu_custom_call.1} parent=11 // pred_fallthru
        _
      // Predicated region
      $region33: #{tpu_custom_call.1} parent=11 // pred_check
        %p221 = pneg %p165
      $region34: #{tpu_custom_call.1} parent=11 // pred_check_branch
        %223 = sbr.rel (%p221) target = $region36
      $region35: #{tpu_custom_call.1} parent=11 // pred_region
        _
      $region36: #{tpu_custom_call.1} parent=11 // pred_fallthru
        _
    $region12: #{tpu_custom_call.1} parent=5 // pred_fallthru
      _
    %p224 = scmp.lt.s32.totalorder %s13, 2
    // Predicated region
    $region37: #{tpu_custom_call.1} parent=5 // pred_check
      %p225 = pneg %p224
    $region38: #{tpu_custom_call.1} parent=5 // pred_check_branch
      %227 = sbr.rel (%p225) target = $region40
    $region39: #{tpu_custom_call.1} parent=5 // pred_region
      // Predicated region
      $region41: #{tpu_custom_call.1} parent=39 // pred_check
        %p228 = pneg %p33
      $region42: #{tpu_custom_call.1} parent=39 // pred_check_branch
        %230 = sbr.rel (%p228) target = $region44
      $region43: #{tpu_custom_call.1} parent=39 // pred_region
        %s231 = smul.u32 64, %s13
        %p232 = scmp.lt.s32.totalorder %s231, 127
        %s233 = scalar_select %p232, %s231, 127
        %s234 = smul.addr %s233, 8
        %s235 = scalar_lea.vmem %s0, %s234
        %s236 = smul.u32 64, %s13
      $region44: #{tpu_custom_call.1} parent=39 // pred_fallthru
        _
    $region40: #{tpu_custom_call.1} parent=5 // pred_fallthru
      _
    %p237 = scmp.le.s32.totalorder 1, %s13
    %p238 = scmp.lt.s32.totalorder %s13, 3
    %p239 = pnand %p237, %p238
    %p240 = pneg %p239
    // Predicated region
    $region45: #{tpu_custom_call.1} parent=5 // pred_check
      _
    $region46: #{tpu_custom_call.1} parent=5 // pred_check_branch
      %242 = sbr.rel (%p239) target = $region48
    $region47: #{tpu_custom_call.1} parent=5 // pred_region
      %s243 = ssub.s32 %s13, 1
      %s244 = smul.u32 64, %s18
      %p245 = scmp.lt.s32.totalorder %s244, 127
      %s246 = scalar_select %p245, %s244, 127
      %s247 = smul.addr %s246, 8
      %s248 = scalar_lea.vmem %s0, %s247
      %p249 = pneg %p39
      %p250 = pneg %p36
      %p251 = pneg %p60
      %p252 = pneg %p57
      %p253 = pneg %p81
      %p254 = pneg %p78
      %p255 = pneg %p102
      %p256 = pneg %p99
      %p257 = pneg %p123
      %p258 = pneg %p120
      %p259 = pneg %p144
      %p260 = pneg %p141
      %p261 = pneg %p165
      %p262 = pneg %p162
      %p263 = pneg %p191
      %p264 = pneg %p188
      %s265 = smul.u32 64, %s18
      %p266 = scmp.lt.s32.totalorder %s265, 127
      %s267 = scalar_select %p266, %s265, 127
      %s268 = smul.addr %s267, 8
      %s269 = scalar_lea.vmem %s7, %s268
      %s270 = smul.u32 64, %s18
      %p271 = scmp.lt.s32.totalorder %s270, 127
      %s272 = scalar_select %p271, %s270, 127
      %s273 = smul.addr %s272, 8
      %s274 = scalar_lea.vmem %s0, %s273
      %s275 = smul.u32 64, %s18
      %s276 = smul.u32 64, %s18
      %p277 = scmp.lt.s32.totalorder %s276, 127
      %s278 = scalar_select %p277, %s276, 127
      %s279 = smul.addr %s278, 8
      %s280 = scalar_lea.vmem %s7, %s279
      %s281 = smul.u32 64, %s18
      %v283 = vld [vmem:[%s274] sm:$0xff]
      %v284 = vld [vmem:[%s274 + $0x8] sm:$0xff]
      %v285 = vld [vmem:[%s274 + $0x10] sm:$0xff]
      %v286 = vld [vmem:[%s274 + $0x18] sm:$0xff]
      %v287 = vld [vmem:[%s274 + $0x20] sm:$0xff]
      %v288 = vld [vmem:[%s274 + $0x28] sm:$0xff]
      %v289 = vld [vmem:[%s274 + $0x30] sm:$0xff]
      %v290 = vld [vmem:[%s274 + $0x38] sm:$0xff]
      %v291 = vld [vmem:[%s274 + $0x40] sm:$0xff]
      %v292 = vld [vmem:[%s274 + $0x48] sm:$0xff]
      %v293 = vld [vmem:[%s274 + $0x50] sm:$0xff]
      %v294 = vld [vmem:[%s274 + $0x58] sm:$0xff]
      %v295 = vld [vmem:[%s274 + $0x60] sm:$0xff]
      %v296 = vld [vmem:[%s274 + $0x68] sm:$0xff]
      %v297 = vld [vmem:[%s274 + $0x70] sm:$0xff]
      %v298 = vld [vmem:[%s274 + $0x78] sm:$0xff]
      %v299 = vld [vmem:[%s274 + $0x80] sm:$0xff]
      %v300 = vld [vmem:[%s274 + $0x88] sm:$0xff]
      %v301 = vld [vmem:[%s274 + $0x90] sm:$0xff]
      %v302 = vld [vmem:[%s274 + $0x98] sm:$0xff]
      %v303 = vld [vmem:[%s274 + $0xa0] sm:$0xff]
      %v304 = vld [vmem:[%s274 + $0xa8] sm:$0xff]
      %v305 = vld [vmem:[%s274 + $0xb0] sm:$0xff]
      %v306 = vld [vmem:[%s274 + $0xb8] sm:$0xff]
      %v307 = vld [vmem:[%s274 + $0xc0] sm:$0xff]
      %v308 = vld [vmem:[%s274 + $0xc8] sm:$0xff]
      %v309 = vld [vmem:[%s274 + $0xd0] sm:$0xff]
      %v310 = vld [vmem:[%s274 + $0xd8] sm:$0xff]
      %v311 = vld [vmem:[%s274 + $0xe0] sm:$0xff]
      %v312 = vld [vmem:[%s274 + $0xe8] sm:$0xff]
      %v313 = vld [vmem:[%s274 + $0xf0] sm:$0xff]
      %v314 = vld [vmem:[%s274 + $0xf8] sm:$0xff]
      %v315 = vld [vmem:[%s274 + $0x100] sm:$0xff]
      %v316 = vld [vmem:[%s274 + $0x108] sm:$0xff]
      %v317 = vld [vmem:[%s274 + $0x110] sm:$0xff]
      %v318 = vld [vmem:[%s274 + $0x118] sm:$0xff]
      %v319 = vld [vmem:[%s274 + $0x120] sm:$0xff]
      %v320 = vld [vmem:[%s274 + $0x128] sm:$0xff]
      %v321 = vld [vmem:[%s274 + $0x130] sm:$0xff]
      %v322 = vld [vmem:[%s274 + $0x138] sm:$0xff]
      %v323 = vld [vmem:[%s274 + $0x140] sm:$0xff]
      %v324 = vld [vmem:[%s274 + $0x148] sm:$0xff]
      %v325 = vld [vmem:[%s274 + $0x150] sm:$0xff]
      %v326 = vld [vmem:[%s274 + $0x158] sm:$0xff]
      %v327 = vld [vmem:[%s274 + $0x160] sm:$0xff]
      %v328 = vld [vmem:[%s274 + $0x168] sm:$0xff]
      %v329 = vld [vmem:[%s274 + $0x170] sm:$0xff]
      %v330 = vld [vmem:[%s274 + $0x178] sm:$0xff]
      %v331 = vld [vmem:[%s274 + $0x180] sm:$0xff]
      %v332 = vld [vmem:[%s274 + $0x188] sm:$0xff]
      %v333 = vld [vmem:[%s274 + $0x190] sm:$0xff]
      %v334 = vld [vmem:[%s274 + $0x198] sm:$0xff]
      %v335 = vld [vmem:[%s274 + $0x1a0] sm:$0xff]
      %v336 = vld [vmem:[%s274 + $0x1a8] sm:$0xff]
      %v337 = vld [vmem:[%s274 + $0x1b0] sm:$0xff]
      %v338 = vld [vmem:[%s274 + $0x1b8] sm:$0xff]
      %v339 = vld [vmem:[%s274 + $0x1c0] sm:$0xff]
      %v340 = vld [vmem:[%s274 + $0x1c8] sm:$0xff]
      %v341 = vld [vmem:[%s274 + $0x1d0] sm:$0xff]
      %v342 = vld [vmem:[%s274 + $0x1d8] sm:$0xff]
      %v343 = vld [vmem:[%s274 + $0x1e0] sm:$0xff]
      %v344 = vld [vmem:[%s274 + $0x1e8] sm:$0xff]
      %v345 = vld [vmem:[%s274 + $0x1f0] sm:$0xff]
      %v346 = vld [vmem:[%s274 + $0x1f8] sm:$0xff]
      %v347 = vpack.c.bf16 %v284, %v283
      %v348 = vpack.c.bf16 %v286, %v285
      %v349 = vpack.c.bf16 %v288, %v287
      %v350 = vpack.c.bf16 %v290, %v289
      %v351 = vpack.c.bf16 %v292, %v291
      %v352 = vpack.c.bf16 %v294, %v293
      %v353 = vpack.c.bf16 %v296, %v295
      %v354 = vpack.c.bf16 %v298, %v297
      %v355 = vpack.c.bf16 %v300, %v299
      %v356 = vpack.c.bf16 %v302, %v301
      %v357 = vpack.c.bf16 %v304, %v303
      %v358 = vpack.c.bf16 %v306, %v305
      %v359 = vpack.c.bf16 %v308, %v307
      %v360 = vpack.c.bf16 %v310, %v309
      %v361 = vpack.c.bf16 %v312, %v311
      %v362 = vpack.c.bf16 %v314, %v313
      %v363 = vpack.c.bf16 %v316, %v315
      %v364 = vpack.c.bf16 %v318, %v317
      %v365 = vpack.c.bf16 %v320, %v319
      %v366 = vpack.c.bf16 %v322, %v321
      %v367 = vpack.c.bf16 %v324, %v323
      %v368 = vpack.c.bf16 %v326, %v325
      %v369 = vpack.c.bf16 %v328, %v327
      %v370 = vpack.c.bf16 %v330, %v329
      %v371 = vpack.c.bf16 %v332, %v331
      %v372 = vpack.c.bf16 %v334, %v333
      %v373 = vpack.c.bf16 %v336, %v335
      %v374 = vpack.c.bf16 %v338, %v337
      %v375 = vpack.c.bf16 %v340, %v339
      %v376 = vpack.c.bf16 %v342, %v341
      %v377 = vpack.c.bf16 %v344, %v343
      %v378 = vpack.c.bf16 %v346, %v345
      %v379 = vld [vmem:[%s1] sm:$0xf]
      %v380 = vld [vmem:[%s1 + $0x4] sm:$0xf]
      %v381 = vld [vmem:[%s2] sm:$0x1]
      %v383 = vlaneseq
      %v384 = vshrl.u32 %v383, 7
      %v385 = vsub.s32 0, %v384
      %v386 = vrot.slane %v381, %v385
      %v390 = vunpack.c.l.b16 %v379
      %v391 = vunpack.c.l.b16 %v380
      %v392 = vpack.c.b16 %v391, %v390
      %vm394 = vcmask 130048
      %v396 = vsel %vm394, %v347, 0
      %v399 = vsel %vm394, %v348, 0
      %v402 = vsel %vm394, %v349, 0
      %v405 = vsel %vm394, %v350, 0
      %v408 = vsel %vm394, %v351, 0
      %v411 = vsel %vm394, %v352, 0
      %v414 = vsel %vm394, %v353, 0
      %v417 = vsel %vm394, %v354, 0
      %v420 = vsel %vm394, %v355, 0
      %v423 = vsel %vm394, %v356, 0
      %v426 = vsel %vm394, %v357, 0
      %v429 = vsel %vm394, %v358, 0
      %v432 = vsel %vm394, %v359, 0
      %v435 = vsel %vm394, %v360, 0
      %v438 = vsel %vm394, %v361, 0
      %v441 = vsel %vm394, %v362, 0
      %v444 = vsel %vm394, %v363, 0
      %v447 = vsel %vm394, %v364, 0
      %v450 = vsel %vm394, %v365, 0
      %v453 = vsel %vm394, %v366, 0
      %v456 = vsel %vm394, %v367, 0
      %v459 = vsel %vm394, %v368, 0
      %v462 = vsel %vm394, %v369, 0
      %v465 = vsel %vm394, %v370, 0
      %v468 = vsel %vm394, %v371, 0
      %v471 = vsel %vm394, %v372, 0
      %v474 = vsel %vm394, %v373, 0
      %v477 = vsel %vm394, %v374, 0
      %v480 = vsel %vm394, %v375, 0
      %v483 = vsel %vm394, %v376, 0
      %v486 = vsel %vm394, %v377, 0
      %v489 = vsel %vm394, %v378, 0
      %491 = vmatprep.subr.bf16.mxu0 0
      %492 = vmatpush1.bf16.msra.mxu0 %v392
      %493 = vmatprep.subr.bf16.mxu0 0
      %494 = vmatpush1.bf16.msra.mxu0 0
      %495 = vmatprep.subr.bf16.mxu0 0
      %496 = vmatpush1.bf16.msra.mxu0 0
      %497 = vmatprep.subr.bf16.mxu0 0
      %498 = vmatpush1.bf16.msra.mxu0 0
      %499 = vmatprep.subr.bf16.mxu0 0
      %500 = vmatpush1.bf16.msra.mxu0 0
      %501 = vmatprep.subr.bf16.mxu0 0
      %502 = vmatpush1.bf16.msra.mxu0 0
      %503 = vmatprep.subr.bf16.mxu0 0
      %504 = vmatpush1.bf16.msra.mxu0 0
      %505 = vmatprep.subr.bf16.mxu0 0
      %506 = vmatpush1.bf16.msra.mxu0 0
      %507 = vmatprep.subr.bf16.mxu0 0
      %508 = vmatpush1.bf16.msra.mxu0 0
      %509 = vmatprep.subr.bf16.mxu0 0
      %510 = vmatpush1.bf16.msra.mxu0 0
      %511 = vmatprep.subr.bf16.mxu0 0
      %512 = vmatpush1.bf16.msra.mxu0 0
      %513 = vmatprep.subr.bf16.mxu0 0
      %514 = vmatpush1.bf16.msra.mxu0 0
      %515 = vmatprep.subr.bf16.mxu0 0
      %516 = vmatpush1.bf16.msra.mxu0 0
      %517 = vmatprep.subr.bf16.mxu0 0
      %518 = vmatpush1.bf16.msra.mxu0 0
      %519 = vmatprep.subr.bf16.mxu0 0
      %520 = vmatpush1.bf16.msra.mxu0 0
      %521 = vmatprep.subr.bf16.mxu0 0
      %522 = vmatpush1.bf16.msra.mxu0 0
      %523 = vmatprep.mubr.bf16.mxu0 0
      %524 = vmatmul.mubr.bf16.gmra.mrb[0].mxu0 %v396
      %v525 = vpop.f32.mrb[0].mxu0
      %v526 = vadd.f32 %v386, %v525
      %v527 = vpop.f32.mrb[0].mxu0
      %v528 = vpop.f32.mrb[0].mxu0
      %v529 = vadd.f32 %v386, %v528
      %v530 = vpop.f32.mrb[0].mxu0
      %531 = vmatprep.mubr.bf16.mxu0 0
      %532 = vmatmul.mubr.bf16.gmra.mrb[0].mxu0 %v399
      %v533 = vpop.f32.mrb[0].mxu0
      %v534 = vadd.f32 %v386, %v533
      %v535 = vpop.f32.mrb[0].mxu0
      %v536 = vpop.f32.mrb[0].mxu0
      %v537 = vadd.f32 %v386, %v536
      %v538 = vpop.f32.mrb[0].mxu0
      %539 = vmatprep.mubr.bf16.mxu0 0
      %540 = vmatmul.mubr.bf16.gmra.mrb[0].mxu0 %v402
      %v541 = vpop.f32.mrb[0].mxu0
      %v542 = vadd.f32 %v386, %v541
      %v543 = vpop.f32.mrb[0].mxu0
      %v544 = vpop.f32.mrb[0].mxu0
      %v545 = vadd.f32 %v386, %v544
      %v546 = vpop.f32.mrb[0].mxu0
      %547 = vmatprep.mubr.bf16.mxu0 0
      %548 = vmatmul.mubr.bf16.gmra.mrb[0].mxu0 %v405
      %v549 = vpop.f32.mrb[0].mxu0
      %v550 = vadd.f32 %v386, %v549
      %v551 = vpop.f32.mrb[0].mxu0
      %v552 = vpop.f32.mrb[0].mxu0
      %v553 = vadd.f32 %v386, %v552
      %v554 = vpop.f32.mrb[0].mxu0
      %555 = vmatprep.mubr.bf16.mxu0 0
      %556 = vmatmul.mubr.bf16.gmra.mrb[0].mxu0 %v408
      %v557 = vpop.f32.mrb[0].mxu0
      %v558 = vadd.f32 %v386, %v557
      %v559 = vpop.f32.mrb[0].mxu0
      %v560 = vpop.f32.mrb[0].mxu0
      %v561 = vadd.f32 %v386, %v560
      %v562 = vpop.f32.mrb[0].mxu0
      %563 = vmatprep.mubr.bf16.mxu0 0
      %564 = vmatmul.mubr.bf16.gmra.mrb[0].mxu0 %v411
      %v565 = vpop.f32.mrb[0].mxu0
      %v566 = vadd.f32 %v386, %v565
      %v567 = vpop.f32.mrb[0].mxu0
      %v568 = vpop.f32.mrb[0].mxu0
      %v569 = vadd.f32 %v386, %v568
      %v570 = vpop.f32.mrb[0].mxu0
      %571 = vmatprep.mubr.bf16.mxu0 0
      %572 = vmatmul.mubr.bf16.gmra.mrb[0].mxu0 %v414
      %v573 = vpop.f32.mrb[0].mxu0
      %v574 = vadd.f32 %v386, %v573
      %v575 = vpop.f32.mrb[0].mxu0
      %v576 = vpop.f32.mrb[0].mxu0
      %v577 = vadd.f32 %v386, %v576
      %v578 = vpop.f32.mrb[0].mxu0
      %579 = vmatprep.mubr.bf16.mxu0 0
      %580 = vmatmul.mubr.bf16.gmra.mrb[0].mxu0 %v417
      %v581 = vpop.f32.mrb[0].mxu0
      %v582 = vadd.f32 %v386, %v581
      %v583 = vpop.f32.mrb[0].mxu0
      %v584 = vpop.f32.mrb[0].mxu0
      %v585 = vadd.f32 %v386, %v584
      %v586 = vpop.f32.mrb[0].mxu0
      %587 = vmatprep.mubr.bf16.mxu0 0
      %588 = vmatmul.mubr.bf16.gmra.mrb[0].mxu0 %v420
      %v589 = vpop.f32.mrb[0].mxu0
      %v590 = vadd.f32 %v386, %v589
      %v591 = vpop.f32.mrb[0].mxu0
      %v592 = vpop.f32.mrb[0].mxu0
      %v593 = vadd.f32 %v386, %v592
      %v594 = vpop.f32.mrb[0].mxu0
      %595 = vmatprep.mubr.bf16.mxu0 0
      %596 = vmatmul.mubr.bf16.gmra.mrb[0].mxu0 %v423
      %v597 = vpop.f32.mrb[0].mxu0
      %v598 = vadd.f32 %v386, %v597
      %v599 = vpop.f32.mrb[0].mxu0
      %v600 = vpop.f32.mrb[0].mxu0
      %v601 = vadd.f32 %v386, %v600
      %v602 = vpop.f32.mrb[0].mxu0
      %603 = vmatprep.mubr.bf16.mxu0 0
      %604 = vmatmul.mubr.bf16.gmra.mrb[0].mxu0 %v426
      %v605 = vpop.f32.mrb[0].mxu0
      %v606 = vadd.f32 %v386, %v605
      %v607 = vpop.f32.mrb[0].mxu0
      %v608 = vpop.f32.mrb[0].mxu0
      %v609 = vadd.f32 %v386, %v608
      %v610 = vpop.f32.mrb[0].mxu0
      %611 = vmatprep.mubr.bf16.mxu0 0
      %612 = vmatmul.mubr.bf16.gmra.mrb[0].mxu0 %v429
      %v613 = vpop.f32.mrb[0].mxu0
      %v614 = vadd.f32 %v386, %v613
      %v615 = vpop.f32.mrb[0].mxu0
      %v616 = vpop.f32.mrb[0].mxu0
      %v617 = vadd.f32 %v386, %v616
      %v618 = vpop.f32.mrb[0].mxu0
      %619 = vmatprep.mubr.bf16.mxu0 0
      %620 = vmatmul.mubr.bf16.gmra.mrb[0].mxu0 %v432
      %v621 = vpop.f32.mrb[0].mxu0
      %v622 = vadd.f32 %v386, %v621
      %v623 = vpop.f32.mrb[0].mxu0
      %v624 = vpop.f32.mrb[0].mxu0
      %v625 = vadd.f32 %v386, %v624
      %v626 = vpop.f32.mrb[0].mxu0
      %627 = vmatprep.mubr.bf16.mxu0 0
      %628 = vmatmul.mubr.bf16.gmra.mrb[0].mxu0 %v435
      %v629 = vpop.f32.mrb[0].mxu0
      %v630 = vadd.f32 %v386, %v629
      %v631 = vpop.f32.mrb[0].mxu0
      %v632 = vpop.f32.mrb[0].mxu0
      %v633 = vadd.f32 %v386, %v632
      %v634 = vpop.f32.mrb[0].mxu0
      %635 = vmatprep.mubr.bf16.mxu0 0
      %636 = vmatmul.mubr.bf16.gmra.mrb[0].mxu0 %v438
      %v637 = vpop.f32.mrb[0].mxu0
      %v638 = vadd.f32 %v386, %v637
      %v639 = vpop.f32.mrb[0].mxu0
      %v640 = vpop.f32.mrb[0].mxu0
      %v641 = vadd.f32 %v386, %v640
      %v642 = vpop.f32.mrb[0].mxu0
      %643 = vmatprep.mubr.bf16.mxu0 0
      %644 = vmatmul.mubr.bf16.gmra.mrb[0].mxu0 %v441
      %v645 = vpop.f32.mrb[0].mxu0
      %v646 = vadd.f32 %v386, %v645
      %v647 = vpop.f32.mrb[0].mxu0
      %v648 = vpop.f32.mrb[0].mxu0
      %v649 = vadd.f32 %v386, %v648
      %v650 = vpop.f32.mrb[0].mxu0
      %651 = vmatprep.mubr.bf16.mxu0 0
      %652 = vmatmul.mubr.bf16.gmra.mrb[0].mxu0 %v444
      %v653 = vpop.f32.mrb[0].mxu0
      %v654 = vadd.f32 %v386, %v653
      %v655 = vpop.f32.mrb[0].mxu0
      %v656 = vpop.f32.mrb[0].mxu0
      %v657 = vadd.f32 %v386, %v656
      %v658 = vpop.f32.mrb[0].mxu0
      %659 = vmatprep.mubr.bf16.mxu0 0
      %660 = vmatmul.mubr.bf16.gmra.mrb[0].mxu0 %v447
      %v661 = vpop.f32.mrb[0].mxu0
      %v662 = vadd.f32 %v386, %v661
      %v663 = vpop.f32.mrb[0].mxu0
      %v664 = vpop.f32.mrb[0].mxu0
      %v665 = vadd.f32 %v386, %v664
      %v666 = vpop.f32.mrb[0].mxu0
      %667 = vmatprep.mubr.bf16.mxu0 0
      %668 = vmatmul.mubr.bf16.gmra.mrb[0].mxu0 %v450
      %v669 = vpop.f32.mrb[0].mxu0
      %v670 = vadd.f32 %v386, %v669
      %v671 = vpop.f32.mrb[0].mxu0
      %v672 = vpop.f32.mrb[0].mxu0
      %v673 = vadd.f32 %v386, %v672
      %v674 = vpop.f32.mrb[0].mxu0
      %675 = vmatprep.mubr.bf16.mxu0 0
      %676 = vmatmul.mubr.bf16.gmra.mrb[0].mxu0 %v453
      %v677 = vpop.f32.mrb[0].mxu0
      %v678 = vadd.f32 %v386, %v677
      %v679 = vpop.f32.mrb[0].mxu0
      %v680 = vpop.f32.mrb[0].mxu0
      %v681 = vadd.f32 %v386, %v680
      %v682 = vpop.f32.mrb[0].mxu0
      %683 = vmatprep.mubr.bf16.mxu0 0
      %684 = vmatmul.mubr.bf16.gmra.mrb[0].mxu0 %v456
      %v685 = vpop.f32.mrb[0].mxu0
      %v686 = vadd.f32 %v386, %v685
      %v687 = vpop.f32.mrb[0].mxu0
      %v688 = vpop.f32.mrb[0].mxu0
      %v689 = vadd.f32 %v386, %v688
      %v690 = vpop.f32.mrb[0].mxu0
      %691 = vmatprep.mubr.bf16.mxu0 0
      %692 = vmatmul.mubr.bf16.gmra.mrb[0].mxu0 %v459
      %v693 = vpop.f32.mrb[0].mxu0
      %v694 = vadd.f32 %v386, %v693
      %v695 = vpop.f32.mrb[0].mxu0
      %v696 = vpop.f32.mrb[0].mxu0
      %v697 = vadd.f32 %v386, %v696
      %v698 = vpop.f32.mrb[0].mxu0
      %699 = vmatprep.mubr.bf16.mxu0 0
      %700 = vmatmul.mubr.bf16.gmra.mrb[0].mxu0 %v462
      %v701 = vpop.f32.mrb[0].mxu0
      %v702 = vadd.f32 %v386, %v701
      %v703 = vpop.f32.mrb[0].mxu0
      %v704 = vpop.f32.mrb[0].mxu0
      %v705 = vadd.f32 %v386, %v704
      %v706 = vpop.f32.mrb[0].mxu0
      %707 = vmatprep.mubr.bf16.mxu0 0
      %708 = vmatmul.mubr.bf16.gmra.mrb[0].mxu0 %v465
      %v709 = vpop.f32.mrb[0].mxu0
      %v710 = vadd.f32 %v386, %v709
      %v711 = vpop.f32.mrb[0].mxu0
      %v712 = vpop.f32.mrb[0].mxu0
      %v713 = vadd.f32 %v386, %v712
      %v714 = vpop.f32.mrb[0].mxu0
      %715 = vmatprep.mubr.bf16.mxu0 0
      %716 = vmatmul.mubr.bf16.gmra.mrb[0].mxu0 %v468
      %v717 = vpop.f32.mrb[0].mxu0
      %v718 = vadd.f32 %v386, %v717
      %v719 = vpop.f32.mrb[0].mxu0
      %v720 = vpop.f32.mrb[0].mxu0
      %v721 = vadd.f32 %v386, %v720
      %v722 = vpop.f32.mrb[0].mxu0
      %723 = vmatprep.mubr.bf16.mxu0 0
      %724 = vmatmul.mubr.bf16.gmra.mrb[0].mxu0 %v471
      %v725 = vpop.f32.mrb[0].mxu0
      %v726 = vadd.f32 %v386, %v725
      %v727 = vpop.f32.mrb[0].mxu0
      %v728 = vpop.f32.mrb[0].mxu0
      %v729 = vadd.f32 %v386, %v728
      %v730 = vpop.f32.mrb[0].mxu0
      %731 = vmatprep.mubr.bf16.mxu0 0
      %732 = vmatmul.mubr.bf16.gmra.mrb[0].mxu0 %v474
      %v733 = vpop.f32.mrb[0].mxu0
      %v734 = vadd.f32 %v386, %v733
      %v735 = vpop.f32.mrb[0].mxu0
      %v736 = vpop.f32.mrb[0].mxu0
      %v737 = vadd.f32 %v386, %v736
      %v738 = vpop.f32.mrb[0].mxu0
      %739 = vmatprep.mubr.bf16.mxu0 0
      %740 = vmatmul.mubr.bf16.gmra.mrb[0].mxu0 %v477
      %v741 = vpop.f32.mrb[0].mxu0
      %v742 = vadd.f32 %v386, %v741
      %v743 = vpop.f32.mrb[0].mxu0
      %v744 = vpop.f32.mrb[0].mxu0
      %v745 = vadd.f32 %v386, %v744
      %v746 = vpop.f32.mrb[0].mxu0
      %747 = vmatprep.mubr.bf16.mxu0 0
      %748 = vmatmul.mubr.bf16.gmra.mrb[0].mxu0 %v480
      %v749 = vpop.f32.mrb[0].mxu0
      %v750 = vadd.f32 %v386, %v749
      %v751 = vpop.f32.mrb[0].mxu0
      %v752 = vpop.f32.mrb[0].mxu0
      %v753 = vadd.f32 %v386, %v752
      %v754 = vpop.f32.mrb[0].mxu0
      %755 = vmatprep.mubr.bf16.mxu0 0
      %756 = vmatmul.mubr.bf16.gmra.mrb[0].mxu0 %v483
      %v757 = vpop.f32.mrb[0].mxu0
      %v758 = vadd.f32 %v386, %v757
      %v759 = vpop.f32.mrb[0].mxu0
      %v760 = vpop.f32.mrb[0].mxu0
      %v761 = vadd.f32 %v386, %v760
      %v762 = vpop.f32.mrb[0].mxu0
      %763 = vmatprep.mubr.bf16.mxu0 0
      %764 = vmatmul.mubr.bf16.gmra.mrb[0].mxu0 %v486
      %v765 = vpop.f32.mrb[0].mxu0
      %v766 = vadd.f32 %v386, %v765
      %v767 = vpop.f32.mrb[0].mxu0
      %v768 = vpop.f32.mrb[0].mxu0
      %v769 = vadd.f32 %v386, %v768
      %v770 = vpop.f32.mrb[0].mxu0
      %771 = vmatprep.mubr.bf16.mxu0 0
      %772 = vmatmul.mubr.bf16.gmra.mrb[0].mxu0 %v489
      %v773 = vpop.f32.mrb[0].mxu0
      %v774 = vadd.f32 %v386, %v773
      %v775 = vpop.f32.mrb[0].mxu0
      %v776 = vpop.f32.mrb[0].mxu0
      %v777 = vadd.f32 %v386, %v776
      %v778 = vpop.f32.mrb[0].mxu0
      %779 = vdwg.mxu0
      %v780 = vmax.f32 %v526, 0.0
      %v781 = vmax.f32 %v529, 0.0
      %v782 = vmax.f32 %v534, 0.0
      %v783 = vmax.f32 %v537, 0.0
      %v784 = vmax.f32 %v542, 0.0
      %v785 = vmax.f32 %v545, 0.0
      %v786 = vmax.f32 %v550, 0.0
      %v787 = vmax.f32 %v553, 0.0
      %v788 = vmax.f32 %v558, 0.0
      %v789 = vmax.f32 %v561, 0.0
      %v790 = vmax.f32 %v566, 0.0
      %v791 = vmax.f32 %v569, 0.0
      %v792 = vmax.f32 %v574, 0.0
      %v793 = vmax.f32 %v577, 0.0
      %v794 = vmax.f32 %v582, 0.0
      %v795 = vmax.f32 %v585, 0.0
      %v796 = vmax.f32 %v590, 0.0
      %v797 = vmax.f32 %v593, 0.0
      %v798 = vmax.f32 %v598, 0.0
      %v799 = vmax.f32 %v601, 0.0
      %v800 = vmax.f32 %v606, 0.0
      %v801 = vmax.f32 %v609, 0.0
      %v802 = vmax.f32 %v614, 0.0
      %v803 = vmax.f32 %v617, 0.0
      %v804 = vmax.f32 %v622, 0.0
      %v805 = vmax.f32 %v625, 0.0
      %v806 = vmax.f32 %v630, 0.0
      %v807 = vmax.f32 %v633, 0.0
      %v808 = vmax.f32 %v638, 0.0
      %v809 = vmax.f32 %v641, 0.0
      %v810 = vmax.f32 %v646, 0.0
      %v811 = vmax.f32 %v649, 0.0
      %v812 = vmax.f32 %v654, 0.0
      %v813 = vmax.f32 %v657, 0.0
      %v814 = vmax.f32 %v662, 0.0
      %v815 = vmax.f32 %v665, 0.0
      %v816 = vmax.f32 %v670, 0.0
      %v817 = vmax.f32 %v673, 0.0
      %v818 = vmax.f32 %v678, 0.0
      %v819 = vmax.f32 %v681, 0.0
      %v820 = vmax.f32 %v686, 0.0
      %v821 = vmax.f32 %v689, 0.0
      %v822 = vmax.f32 %v694, 0.0
      %v823 = vmax.f32 %v697, 0.0
      %v824 = vmax.f32 %v702, 0.0
      %v825 = vmax.f32 %v705, 0.0
      %v826 = vmax.f32 %v710, 0.0
      %v827 = vmax.f32 %v713, 0.0
      %v828 = vmax.f32 %v718, 0.0
      %v829 = vmax.f32 %v721, 0.0
      %v830 = vmax.f32 %v726, 0.0
      %v831 = vmax.f32 %v729, 0.0
      %v832 = vmax.f32 %v734, 0.0
      %v833 = vmax.f32 %v737, 0.0
      %v834 = vmax.f32 %v742, 0.0
      %v835 = vmax.f32 %v745, 0.0
      %v836 = vmax.f32 %v750, 0.0
      %v837 = vmax.f32 %v753, 0.0
      %v838 = vmax.f32 %v758, 0.0
      %v839 = vmax.f32 %v761, 0.0
      %v840 = vmax.f32 %v766, 0.0
      %v841 = vmax.f32 %v769, 0.0
      %v842 = vmax.f32 %v774, 0.0
      %v843 = vmax.f32 %v777, 0.0
      %v844 = vpack.c.bf16 %v781, %v780
      %v845 = vpack.c.bf16 %v783, %v782
      %v846 = vpack.c.bf16 %v785, %v784
      %v847 = vpack.c.bf16 %v787, %v786
      %v848 = vpack.c.bf16 %v789, %v788
      %v849 = vpack.c.bf16 %v791, %v790
      %v850 = vpack.c.bf16 %v793, %v792
      %v851 = vpack.c.bf16 %v795, %v794
      %v852 = vpack.c.bf16 %v797, %v796
      %v853 = vpack.c.bf16 %v799, %v798
      %v854 = vpack.c.bf16 %v801, %v800
      %v855 = vpack.c.bf16 %v803, %v802
      %v856 = vpack.c.bf16 %v805, %v804
      %v857 = vpack.c.bf16 %v807, %v806
      %v858 = vpack.c.bf16 %v809, %v808
      %v859 = vpack.c.bf16 %v811, %v810
      %v860 = vpack.c.bf16 %v813, %v812
      %v861 = vpack.c.bf16 %v815, %v814
      %v862 = vpack.c.bf16 %v817, %v816
      %v863 = vpack.c.bf16 %v819, %v818
      %v864 = vpack.c.bf16 %v821, %v820
      %v865 = vpack.c.bf16 %v823, %v822
      %v866 = vpack.c.bf16 %v825, %v824
      %v867 = vpack.c.bf16 %v827, %v826
      %v868 = vpack.c.bf16 %v829, %v828
      %v869 = vpack.c.bf16 %v831, %v830
      %v870 = vpack.c.bf16 %v833, %v832
      %v871 = vpack.c.bf16 %v835, %v834
      %v872 = vpack.c.bf16 %v837, %v836
      %v873 = vpack.c.bf16 %v839, %v838
      %v874 = vpack.c.bf16 %v841, %v840
      %v875 = vpack.c.bf16 %v843, %v842
      %v876 = vld [vmem:[%s3] sm:$0xf]
      %v877 = vld [vmem:[%s3 + $0x4] sm:$0xf]
      %v878 = vld [vmem:[%s3 + $0x8] sm:$0xf]
      %v879 = vld [vmem:[%s3 + $0xc] sm:$0xf]
      %v880 = vld [vmem:[%s3 + $0x10] sm:$0xf]
      %v881 = vld [vmem:[%s3 + $0x14] sm:$0xf]
      %v882 = vld [vmem:[%s3 + $0x18] sm:$0xf]
      %v883 = vld [vmem:[%s3 + $0x1c] sm:$0xf]
      %v884 = vld [vmem:[%s4] sm:$0x1]
      %v886 = vlaneseq
      %v887 = vshrl.u32 %v886, 7
      %v888 = vsub.s32 0, %v887
      %v889 = vrot.slane %v884, %v888
      %v899 = vunpack.c.l.b16 %v876
      %v900 = vunpack.c.l.b16 %v877
      %v901 = vunpack.c.l.b16 %v878
      %v902 = vunpack.c.l.b16 %v879
      %v903 = vunpack.c.l.b16 %v880
      %v904 = vunpack.c.l.b16 %v881
      %v905 = vunpack.c.l.b16 %v882
      %v906 = vunpack.c.l.b16 %v883
      %v907 = vpack.c.b16 %v900, %v899
      %v908 = vpack.c.b16 %v902, %v901
      %v909 = vpack.c.b16 %v904, %v903
      %v910 = vpack.c.b16 %v906, %v905
      %vm915 = vcmask 523264
      %v917 = vsel %vm915, %v844, 0
      %v920 = vsel %vm915, %v845, 0
      %v923 = vsel %vm915, %v846, 0
      %v926 = vsel %vm915, %v847, 0
      %v929 = vsel %vm915, %v848, 0
      %v932 = vsel %vm915, %v849, 0
      %v935 = vsel %vm915, %v850, 0
      %v938 = vsel %vm915, %v851, 0
      %v941 = vsel %vm915, %v852, 0
      %v944 = vsel %vm915, %v853, 0
      %v947 = vsel %vm915, %v854, 0
      %v950 = vsel %vm915, %v855, 0
      %v953 = vsel %vm915, %v856, 0
      %v956 = vsel %vm915, %v857, 0
      %v959 = vsel %vm915, %v858, 0
      %v962 = vsel %vm915, %v859, 0
      %v965 = vsel %vm915, %v860, 0
      %v968 = vsel %vm915, %v861, 0
      %v971 = vsel %vm915, %v862, 0
      %v974 = vsel %vm915, %v863, 0
      %v977 = vsel %vm915, %v864, 0
      %v980 = vsel %vm915, %v865, 0
      %v983 = vsel %vm915, %v866, 0
      %v986 = vsel %vm915, %v867, 0
      %v989 = vsel %vm915, %v868, 0
      %v992 = vsel %vm915, %v869, 0
      %v995 = vsel %vm915, %v870, 0
      %v998 = vsel %vm915, %v871, 0
      %v1001 = vsel %vm915, %v872, 0
      %v1004 = vsel %vm915, %v873, 0
      %v1007 = vsel %vm915, %v874, 0
      %v1010 = vsel %vm915, %v875, 0
      %1012 = vmatprep.subr.bf16.mxu0 0
      %1013 = vmatpush1.bf16.msra.mxu0 %v907
      %1014 = vmatprep.subr.bf16.mxu0 0
      %1015 = vmatpush1.bf16.msra.mxu0 %v908
      %1016 = vmatprep.subr.bf16.mxu0 0
      %1017 = vmatpush1.bf16.msra.mxu0 %v909
      %1018 = vmatprep.subr.bf16.mxu0 0
      %1019 = vmatpush1.bf16.msra.mxu0 %v910
      %1020 = vmatprep.subr.bf16.mxu0 0
      %1021 = vmatpush1.bf16.msra.mxu0 0
      %1022 = vmatprep.subr.bf16.mxu0 0
      %1023 = vmatpush1.bf16.msra.mxu0 0
      %1024 = vmatprep.subr.bf16.mxu0 0
      %1025 = vmatpush1.bf16.msra.mxu0 0
      %1026 = vmatprep.subr.bf16.mxu0 0
      %1027 = vmatpush1.bf16.msra.mxu0 0
      %1028 = vmatprep.subr.bf16.mxu0 0
      %1029 = vmatpush1.bf16.msra.mxu0 0
      %1030 = vmatprep.subr.bf16.mxu0 0
      %1031 = vmatpush1.bf16.msra.mxu0 0
      %1032 = vmatprep.subr.bf16.mxu0 0
      %1033 = vmatpush1.bf16.msra.mxu0 0
      %1034 = vmatprep.subr.bf16.mxu0 0
      %1035 = vmatpush1.bf16.msra.mxu0 0
      %1036 = vmatprep.subr.bf16.mxu0 0
      %1037 = vmatpush1.bf16.msra.mxu0 0
      %1038 = vmatprep.subr.bf16.mxu0 0
      %1039 = vmatpush1.bf16.msra.mxu0 0
      %1040 = vmatprep.subr.bf16.mxu0 0
      %1041 = vmatpush1.bf16.msra.mxu0 0
      %1042 = vmatprep.subr.bf16.mxu0 0
      %1043 = vmatpush1.bf16.msra.mxu0 0
      %1044 = vmatprep.mubr.bf16.mxu0 0
      %1045 = vmatmul.mubr.bf16.gmra.mrb[0].mxu0 %v917
      %v1046 = vpop.f32.mrb[0].mxu0
      %v1047 = vadd.f32 %v889, %v1046
      %v1048 = vpop.f32.mrb[0].mxu0
      %v1049 = vpop.f32.mrb[0].mxu0
      %v1050 = vadd.f32 %v889, %v1049
      %v1051 = vpop.f32.mrb[0].mxu0
      %1052 = vmatprep.mubr.bf16.mxu0 0
      %1053 = vmatmul.mubr.bf16.gmra.mrb[0].mxu0 %v920
      %v1054 = vpop.f32.mrb[0].mxu0
      %v1055 = vadd.f32 %v889, %v1054
      %v1056 = vpop.f32.mrb[0].mxu0
      %v1057 = vpop.f32.mrb[0].mxu0
      %v1058 = vadd.f32 %v889, %v1057
      %v1059 = vpop.f32.mrb[0].mxu0
      %1060 = vmatprep.mubr.bf16.mxu0 0
      %1061 = vmatmul.mubr.bf16.gmra.mrb[0].mxu0 %v923
      %v1062 = vpop.f32.mrb[0].mxu0
      %v1063 = vadd.f32 %v889, %v1062
      %v1064 = vpop.f32.mrb[0].mxu0
      %v1065 = vpop.f32.mrb[0].mxu0
      %v1066 = vadd.f32 %v889, %v1065
      %v1067 = vpop.f32.mrb[0].mxu0
      %1068 = vmatprep.mubr.bf16.mxu0 0
      %1069 = vmatmul.mubr.bf16.gmra.mrb[0].mxu0 %v926
      %v1070 = vpop.f32.mrb[0].mxu0
      %v1071 = vadd.f32 %v889, %v1070
      %v1072 = vpop.f32.mrb[0].mxu0
      %v1073 = vpop.f32.mrb[0].mxu0
      %v1074 = vadd.f32 %v889, %v1073
      %v1075 = vpop.f32.mrb[0].mxu0
      %1076 = vmatprep.mubr.bf16.mxu0 0
      %1077 = vmatmul.mubr.bf16.gmra.mrb[0].mxu0 %v929
      %v1078 = vpop.f32.mrb[0].mxu0
      %v1079 = vadd.f32 %v889, %v1078
      %v1080 = vpop.f32.mrb[0].mxu0
      %v1081 = vpop.f32.mrb[0].mxu0
      %v1082 = vadd.f32 %v889, %v1081
      %v1083 = vpop.f32.mrb[0].mxu0
      %1084 = vmatprep.mubr.bf16.mxu0 0
      %1085 = vmatmul.mubr.bf16.gmra.mrb[0].mxu0 %v932
      %v1086 = vpop.f32.mrb[0].mxu0
      %v1087 = vadd.f32 %v889, %v1086
      %v1088 = vpop.f32.mrb[0].mxu0
      %v1089 = vpop.f32.mrb[0].mxu0
      %v1090 = vadd.f32 %v889, %v1089
      %v1091 = vpop.f32.mrb[0].mxu0
      %1092 = vmatprep.mubr.bf16.mxu0 0
      %1093 = vmatmul.mubr.bf16.gmra.mrb[0].mxu0 %v935
      %v1094 = vpop.f32.mrb[0].mxu0
      %v1095 = vadd.f32 %v889, %v1094
      %v1096 = vpop.f32.mrb[0].mxu0
      %v1097 = vpop.f32.mrb[0].mxu0
      %v1098 = vadd.f32 %v889, %v1097
      %v1099 = vpop.f32.mrb[0].mxu0
      %1100 = vmatprep.mubr.bf16.mxu0 0
      %1101 = vmatmul.mubr.bf16.gmra.mrb[0].mxu0 %v938
      %v1102 = vpop.f32.mrb[0].mxu0
      %v1103 = vadd.f32 %v889, %v1102
      %v1104 = vpop.f32.mrb[0].mxu0
      %v1105 = vpop.f32.mrb[0].mxu0
      %v1106 = vadd.f32 %v889, %v1105
      %v1107 = vpop.f32.mrb[0].mxu0
      %1108 = vmatprep.mubr.bf16.mxu0 0
      %1109 = vmatmul.mubr.bf16.gmra.mrb[0].mxu0 %v941
      %v1110 = vpop.f32.mrb[0].mxu0
      %v1111 = vadd.f32 %v889, %v1110
      %v1112 = vpop.f32.mrb[0].mxu0
      %v1113 = vpop.f32.mrb[0].mxu0
      %v1114 = vadd.f32 %v889, %v1113
      %v1115 = vpop.f32.mrb[0].mxu0
      %1116 = vmatprep.mubr.bf16.mxu0 0
      %1117 = vmatmul.mubr.bf16.gmra.mrb[0].mxu0 %v944
      %v1118 = vpop.f32.mrb[0].mxu0
      %v1119 = vadd.f32 %v889, %v1118
      %v1120 = vpop.f32.mrb[0].mxu0
      %v1121 = vpop.f32.mrb[0].mxu0
      %v1122 = vadd.f32 %v889, %v1121
      %v1123 = vpop.f32.mrb[0].mxu0
      %1124 = vmatprep.mubr.bf16.mxu0 0
      %1125 = vmatmul.mubr.bf16.gmra.mrb[0].mxu0 %v947
      %v1126 = vpop.f32.mrb[0].mxu0
      %v1127 = vadd.f32 %v889, %v1126
      %v1128 = vpop.f32.mrb[0].mxu0
      %v1129 = vpop.f32.mrb[0].mxu0
      %v1130 = vadd.f32 %v889, %v1129
      %v1131 = vpop.f32.mrb[0].mxu0
      %1132 = vmatprep.mubr.bf16.mxu0 0
      %1133 = vmatmul.mubr.bf16.gmra.mrb[0].mxu0 %v950
      %v1134 = vpop.f32.mrb[0].mxu0
      %v1135 = vadd.f32 %v889, %v1134
      %v1136 = vpop.f32.mrb[0].mxu0
      %v1137 = vpop.f32.mrb[0].mxu0
      %v1138 = vadd.f32 %v889, %v1137
      %v1139 = vpop.f32.mrb[0].mxu0
      %1140 = vmatprep.mubr.bf16.mxu0 0
      %1141 = vmatmul.mubr.bf16.gmra.mrb[0].mxu0 %v953
      %v1142 = vpop.f32.mrb[0].mxu0
      %v1143 = vadd.f32 %v889, %v1142
      %v1144 = vpop.f32.mrb[0].mxu0
      %v1145 = vpop.f32.mrb[0].mxu0
      %v1146 = vadd.f32 %v889, %v1145
      %v1147 = vpop.f32.mrb[0].mxu0
      %1148 = vmatprep.mubr.bf16.mxu0 0
      %1149 = vmatmul.mubr.bf16.gmra.mrb[0].mxu0 %v956
      %v1150 = vpop.f32.mrb[0].mxu0
      %v1151 = vadd.f32 %v889, %v1150
      %v1152 = vpop.f32.mrb[0].mxu0
      %v1153 = vpop.f32.mrb[0].mxu0
      %v1154 = vadd.f32 %v889, %v1153
      %v1155 = vpop.f32.mrb[0].mxu0
      %1156 = vmatprep.mubr.bf16.mxu0 0
      %1157 = vmatmul.mubr.bf16.gmra.mrb[0].mxu0 %v959
      %v1158 = vpop.f32.mrb[0].mxu0
      %v1159 = vadd.f32 %v889, %v1158
      %v1160 = vpop.f32.mrb[0].mxu0
      %v1161 = vpop.f32.mrb[0].mxu0
      %v1162 = vadd.f32 %v889, %v1161
      %v1163 = vpop.f32.mrb[0].mxu0
      %1164 = vmatprep.mubr.bf16.mxu0 0
      %1165 = vmatmul.mubr.bf16.gmra.mrb[0].mxu0 %v962
      %v1166 = vpop.f32.mrb[0].mxu0
      %v1167 = vadd.f32 %v889, %v1166
      %v1168 = vpop.f32.mrb[0].mxu0
      %v1169 = vpop.f32.mrb[0].mxu0
      %v1170 = vadd.f32 %v889, %v1169
      %v1171 = vpop.f32.mrb[0].mxu0
      %1172 = vmatprep.mubr.bf16.mxu0 0
      %1173 = vmatmul.mubr.bf16.gmra.mrb[0].mxu0 %v965
      %v1174 = vpop.f32.mrb[0].mxu0
      %v1175 = vadd.f32 %v889, %v1174
      %v1176 = vpop.f32.mrb[0].mxu0
      %v1177 = vpop.f32.mrb[0].mxu0
      %v1178 = vadd.f32 %v889, %v1177
      %v1179 = vpop.f32.mrb[0].mxu0
      %1180 = vmatprep.mubr.bf16.mxu0 0
      %1181 = vmatmul.mubr.bf16.gmra.mrb[0].mxu0 %v968
      %v1182 = vpop.f32.mrb[0].mxu0
      %v1183 = vadd.f32 %v889, %v1182
      %v1184 = vpop.f32.mrb[0].mxu0
      %v1185 = vpop.f32.mrb[0].mxu0
      %v1186 = vadd.f32 %v889, %v1185
      %v1187 = vpop.f32.mrb[0].mxu0
      %1188 = vmatprep.mubr.bf16.mxu0 0
      %1189 = vmatmul.mubr.bf16.gmra.mrb[0].mxu0 %v971
      %v1190 = vpop.f32.mrb[0].mxu0
      %v1191 = vadd.f32 %v889, %v1190
      %v1192 = vpop.f32.mrb[0].mxu0
      %v1193 = vpop.f32.mrb[0].mxu0
      %v1194 = vadd.f32 %v889, %v1193
      %v1195 = vpop.f32.mrb[0].mxu0
      %1196 = vmatprep.mubr.bf16.mxu0 0
      %1197 = vmatmul.mubr.bf16.gmra.mrb[0].mxu0 %v974
      %v1198 = vpop.f32.mrb[0].mxu0
      %v1199 = vadd.f32 %v889, %v1198
      %v1200 = vpop.f32.mrb[0].mxu0
      %v1201 = vpop.f32.mrb[0].mxu0
      %v1202 = vadd.f32 %v889, %v1201
      %v1203 = vpop.f32.mrb[0].mxu0
      %1204 = vmatprep.mubr.bf16.mxu0 0
      %1205 = vmatmul.mubr.bf16.gmra.mrb[0].mxu0 %v977
      %v1206 = vpop.f32.mrb[0].mxu0
      %v1207 = vadd.f32 %v889, %v1206
      %v1208 = vpop.f32.mrb[0].mxu0
      %v1209 = vpop.f32.mrb[0].mxu0
      %v1210 = vadd.f32 %v889, %v1209
      %v1211 = vpop.f32.mrb[0].mxu0
      %1212 = vmatprep.mubr.bf16.mxu0 0
      %1213 = vmatmul.mubr.bf16.gmra.mrb[0].mxu0 %v980
      %v1214 = vpop.f32.mrb[0].mxu0
      %v1215 = vadd.f32 %v889, %v1214
      %v1216 = vpop.f32.mrb[0].mxu0
      %v1217 = vpop.f32.mrb[0].mxu0
      %v1218 = vadd.f32 %v889, %v1217
      %v1219 = vpop.f32.mrb[0].mxu0
      %1220 = vmatprep.mubr.bf16.mxu0 0
      %1221 = vmatmul.mubr.bf16.gmra.mrb[0].mxu0 %v983
      %v1222 = vpop.f32.mrb[0].mxu0
      %v1223 = vadd.f32 %v889, %v1222
      %v1224 = vpop.f32.mrb[0].mxu0
      %v1225 = vpop.f32.mrb[0].mxu0
      %v1226 = vadd.f32 %v889, %v1225
      %v1227 = vpop.f32.mrb[0].mxu0
      %1228 = vmatprep.mubr.bf16.mxu0 0
      %1229 = vmatmul.mubr.bf16.gmra.mrb[0].mxu0 %v986
      %v1230 = vpop.f32.mrb[0].mxu0
      %v1231 = vadd.f32 %v889, %v1230
      %v1232 = vpop.f32.mrb[0].mxu0
      %v1233 = vpop.f32.mrb[0].mxu0
      %v1234 = vadd.f32 %v889, %v1233
      %v1235 = vpop.f32.mrb[0].mxu0
      %1236 = vmatprep.mubr.bf16.mxu0 0
      %1237 = vmatmul.mubr.bf16.gmra.mrb[0].mxu0 %v989
      %v1238 = vpop.f32.mrb[0].mxu0
      %v1239 = vadd.f32 %v889, %v1238
      %v1240 = vpop.f32.mrb[0].mxu0
      %v1241 = vpop.f32.mrb[0].mxu0
      %v1242 = vadd.f32 %v889, %v1241
      %v1243 = vpop.f32.mrb[0].mxu0
      %1244 = vmatprep.mubr.bf16.mxu0 0
      %1245 = vmatmul.mubr.bf16.gmra.mrb[0].mxu0 %v992
      %v1246 = vpop.f32.mrb[0].mxu0
      %v1247 = vadd.f32 %v889, %v1246
      %v1248 = vpop.f32.mrb[0].mxu0
      %v1249 = vpop.f32.mrb[0].mxu0
      %v1250 = vadd.f32 %v889, %v1249
      %v1251 = vpop.f32.mrb[0].mxu0
      %1252 = vmatprep.mubr.bf16.mxu0 0
      %1253 = vmatmul.mubr.bf16.gmra.mrb[0].mxu0 %v995
      %v1254 = vpop.f32.mrb[0].mxu0
      %v1255 = vadd.f32 %v889, %v1254
      %v1256 = vpop.f32.mrb[0].mxu0
      %v1257 = vpop.f32.mrb[0].mxu0
      %v1258 = vadd.f32 %v889, %v1257
      %v1259 = vpop.f32.mrb[0].mxu0
      %1260 = vmatprep.mubr.bf16.mxu0 0
      %1261 = vmatmul.mubr.bf16.gmra.mrb[0].mxu0 %v998
      %v1262 = vpop.f32.mrb[0].mxu0
      %v1263 = vadd.f32 %v889, %v1262
      %v1264 = vpop.f32.mrb[0].mxu0
      %v1265 = vpop.f32.mrb[0].mxu0
      %v1266 = vadd.f32 %v889, %v1265
      %v1267 = vpop.f32.mrb[0].mxu0
      %1268 = vmatprep.mubr.bf16.mxu0 0
      %1269 = vmatmul.mubr.bf16.gmra.mrb[0].mxu0 %v1001
      %v1270 = vpop.f32.mrb[0].mxu0
      %v1271 = vadd.f32 %v889, %v1270
      %v1272 = vpop.f32.mrb[0].mxu0
      %v1273 = vpop.f32.mrb[0].mxu0
      %v1274 = vadd.f32 %v889, %v1273
      %v1275 = vpop.f32.mrb[0].mxu0
      %1276 = vmatprep.mubr.bf16.mxu0 0
      %1277 = vmatmul.mubr.bf16.gmra.mrb[0].mxu0 %v1004
      %v1278 = vpop.f32.mrb[0].mxu0
      %v1279 = vadd.f32 %v889, %v1278
      %v1280 = vpop.f32.mrb[0].mxu0
      %v1281 = vpop.f32.mrb[0].mxu0
      %v1282 = vadd.f32 %v889, %v1281
      %v1283 = vpop.f32.mrb[0].mxu0
      %1284 = vmatprep.mubr.bf16.mxu0 0
      %1285 = vmatmul.mubr.bf16.gmra.mrb[0].mxu0 %v1007
      %v1286 = vpop.f32.mrb[0].mxu0
      %v1287 = vadd.f32 %v889, %v1286
      %v1288 = vpop.f32.mrb[0].mxu0
      %v1289 = vpop.f32.mrb[0].mxu0
      %v1290 = vadd.f32 %v889, %v1289
      %v1291 = vpop.f32.mrb[0].mxu0
      %1292 = vmatprep.mubr.bf16.mxu0 0
      %1293 = vmatmul.mubr.bf16.gmra.mrb[0].mxu0 %v1010
      %v1294 = vpop.f32.mrb[0].mxu0
      %v1295 = vadd.f32 %v889, %v1294
      %v1296 = vpop.f32.mrb[0].mxu0
      %v1297 = vpop.f32.mrb[0].mxu0
      %v1298 = vadd.f32 %v889, %v1297
      %v1299 = vpop.f32.mrb[0].mxu0
      %1300 = vdwg.mxu0
      %v1301 = vmax.f32 %v1047, 0.0
      %v1302 = vmax.f32 %v1050, 0.0
      %v1303 = vmax.f32 %v1055, 0.0
      %v1304 = vmax.f32 %v1058, 0.0
      %v1305 = vmax.f32 %v1063, 0.0
      %v1306 = vmax.f32 %v1066, 0.0
      %v1307 = vmax.f32 %v1071, 0.0
      %v1308 = vmax.f32 %v1074, 0.0
      %v1309 = vmax.f32 %v1079, 0.0
      %v1310 = vmax.f32 %v1082, 0.0
      %v1311 = vmax.f32 %v1087, 0.0
      %v1312 = vmax.f32 %v1090, 0.0
      %v1313 = vmax.f32 %v1095, 0.0
      %v1314 = vmax.f32 %v1098, 0.0
      %v1315 = vmax.f32 %v1103, 0.0
      %v1316 = vmax.f32 %v1106, 0.0
      %v1317 = vmax.f32 %v1111, 0.0
      %v1318 = vmax.f32 %v1114, 0.0
      %v1319 = vmax.f32 %v1119, 0.0
      %v1320 = vmax.f32 %v1122, 0.0
      %v1321 = vmax.f32 %v1127, 0.0
      %v1322 = vmax.f32 %v1130, 0.0
      %v1323 = vmax.f32 %v1135, 0.0
      %v1324 = vmax.f32 %v1138, 0.0
      %v1325 = vmax.f32 %v1143, 0.0
      %v1326 = vmax.f32 %v1146, 0.0
      %v1327 = vmax.f32 %v1151, 0.0
      %v1328 = vmax.f32 %v1154, 0.0
      %v1329 = vmax.f32 %v1159, 0.0
      %v1330 = vmax.f32 %v1162, 0.0
      %v1331 = vmax.f32 %v1167, 0.0
      %v1332 = vmax.f32 %v1170, 0.0
      %v1333 = vmax.f32 %v1175, 0.0
      %v1334 = vmax.f32 %v1178, 0.0
      %v1335 = vmax.f32 %v1183, 0.0
      %v1336 = vmax.f32 %v1186, 0.0
      %v1337 = vmax.f32 %v1191, 0.0
      %v1338 = vmax.f32 %v1194, 0.0
      %v1339 = vmax.f32 %v1199, 0.0
      %v1340 = vmax.f32 %v1202, 0.0
      %v1341 = vmax.f32 %v1207, 0.0
      %v1342 = vmax.f32 %v1210, 0.0
      %v1343 = vmax.f32 %v1215, 0.0
      %v1344 = vmax.f32 %v1218, 0.0
      %v1345 = vmax.f32 %v1223, 0.0
      %v1346 = vmax.f32 %v1226, 0.0
      %v1347 = vmax.f32 %v1231, 0.0
      %v1348 = vmax.f32 %v1234, 0.0
      %v1349 = vmax.f32 %v1239, 0.0
      %v1350 = vmax.f32 %v1242, 0.0
      %v1351 = vmax.f32 %v1247, 0.0
      %v1352 = vmax.f32 %v1250, 0.0
      %v1353 = vmax.f32 %v1255, 0.0
      %v1354 = vmax.f32 %v1258, 0.0
      %v1355 = vmax.f32 %v1263, 0.0
      %v1356 = vmax.f32 %v1266, 0.0
      %v1357 = vmax.f32 %v1271, 0.0
      %v1358 = vmax.f32 %v1274, 0.0
      %v1359 = vmax.f32 %v1279, 0.0
      %v1360 = vmax.f32 %v1282, 0.0
      %v1361 = vmax.f32 %v1287, 0.0
      %v1362 = vmax.f32 %v1290, 0.0
      %v1363 = vmax.f32 %v1295, 0.0
      %v1364 = vmax.f32 %v1298, 0.0
      %v1365 = vpack.c.bf16 %v1302, %v1301
      %v1366 = vpack.c.bf16 %v1304, %v1303
      %v1367 = vpack.c.bf16 %v1306, %v1305
      %v1368 = vpack.c.bf16 %v1308, %v1307
      %v1369 = vpack.c.bf16 %v1310, %v1309
      %v1370 = vpack.c.bf16 %v1312, %v1311
      %v1371 = vpack.c.bf16 %v1314, %v1313
      %v1372 = vpack.c.bf16 %v1316, %v1315
      %v1373 = vpack.c.bf16 %v1318, %v1317
      %v1374 = vpack.c.bf16 %v1320, %v1319
      %v1375 = vpack.c.bf16 %v1322, %v1321
      %v1376 = vpack.c.bf16 %v1324, %v1323
      %v1377 = vpack.c.bf16 %v1326, %v1325
      %v1378 = vpack.c.bf16 %v1328, %v1327
      %v1379 = vpack.c.bf16 %v1330, %v1329
      %v1380 = vpack.c.bf16 %v1332, %v1331
      %v1381 = vpack.c.bf16 %v1334, %v1333
      %v1382 = vpack.c.bf16 %v1336, %v1335
      %v1383 = vpack.c.bf16 %v1338, %v1337
      %v1384 = vpack.c.bf16 %v1340, %v1339
      %v1385 = vpack.c.bf16 %v1342, %v1341
      %v1386 = vpack.c.bf16 %v1344, %v1343
      %v1387 = vpack.c.bf16 %v1346, %v1345
      %v1388 = vpack.c.bf16 %v1348, %v1347
      %v1389 = vpack.c.bf16 %v1350, %v1349
      %v1390 = vpack.c.bf16 %v1352, %v1351
      %v1391 = vpack.c.bf16 %v1354, %v1353
      %v1392 = vpack.c.bf16 %v1356, %v1355
      %v1393 = vpack.c.bf16 %v1358, %v1357
      %v1394 = vpack.c.bf16 %v1360, %v1359
      %v1395 = vpack.c.bf16 %v1362, %v1361
      %v1396 = vpack.c.bf16 %v1364, %v1363
      %v1397 = vld [vmem:[%s5] sm:$0xf]
      %v1398 = vld [vmem:[%s5 + $0x4] sm:$0xf]
      %v1399 = vld [vmem:[%s5 + $0x8] sm:$0xf]
      %v1400 = vld [vmem:[%s5 + $0xc] sm:$0xf]
      %v1401 = vld [vmem:[%s6] sm:$0x1]
      %v1403 = vlaneseq
      %v1404 = vshrl.u32 %v1403, 7
      %v1405 = vsub.s32 0, %v1404
      %v1406 = vrot.slane %v1401, %v1405
      %v1412 = vunpack.c.l.b16 %v1397
      %v1413 = vunpack.c.l.b16 %v1398
      %v1414 = vunpack.c.l.b16 %v1399
      %v1415 = vunpack.c.l.b16 %v1400
      %v1416 = vpack.c.b16 %v1413, %v1412
      %v1417 = vpack.c.b16 %v1415, %v1414
      %vm1420 = vcmask 261120
      %v1422 = vsel %vm1420, %v1365, 0
      %v1425 = vsel %vm1420, %v1366, 0
      %v1428 = vsel %vm1420, %v1367, 0
      %v1431 = vsel %vm1420, %v1368, 0
      %v1434 = vsel %vm1420, %v1369, 0
      %v1437 = vsel %vm1420, %v1370, 0
      %v1440 = vsel %vm1420, %v1371, 0
      %v1443 = vsel %vm1420, %v1372, 0
      %v1446 = vsel %vm1420, %v1373, 0
      %v1449 = vsel %vm1420, %v1374, 0
      %v1452 = vsel %vm1420, %v1375, 0
      %v1455 = vsel %vm1420, %v1376, 0
      %v1458 = vsel %vm1420, %v1377, 0
      %v1461 = vsel %vm1420, %v1378, 0
      %v1464 = vsel %vm1420, %v1379, 0
      %v1467 = vsel %vm1420, %v1380, 0
      %v1470 = vsel %vm1420, %v1381, 0
      %v1473 = vsel %vm1420, %v1382, 0
      %v1476 = vsel %vm1420, %v1383, 0
      %v1479 = vsel %vm1420, %v1384, 0
      %v1482 = vsel %vm1420, %v1385, 0
      %v1485 = vsel %vm1420, %v1386, 0
      %v1488 = vsel %vm1420, %v1387, 0
      %v1491 = vsel %vm1420, %v1388, 0
      %v1494 = vsel %vm1420, %v1389, 0
      %v1497 = vsel %vm1420, %v1390, 0
      %v1500 = vsel %vm1420, %v1391, 0
      %v1503 = vsel %vm1420, %v1392, 0
      %v1506 = vsel %vm1420, %v1393, 0
      %v1509 = vsel %vm1420, %v1394, 0
      %v1512 = vsel %vm1420, %v1395, 0
      %v1515 = vsel %vm1420, %v1396, 0
      %1517 = vmatprep.subr.bf16.mxu0 0
      %1518 = vmatpush1.bf16.msra.mxu0 %v1416
      %1519 = vmatprep.subr.bf16.mxu0 0
      %1520 = vmatpush1.bf16.msra.mxu0 %v1417
      %1521 = vmatprep.subr.bf16.mxu0 0
      %1522 = vmatpush1.bf16.msra.mxu0 0
      %1523 = vmatprep.subr.bf16.mxu0 0
      %1524 = vmatpush1.bf16.msra.mxu0 0
      %1525 = vmatprep.subr.bf16.mxu0 0
      %1526 = vmatpush1.bf16.msra.mxu0 0
      %1527 = vmatprep.subr.bf16.mxu0 0
      %1528 = vmatpush1.bf16.msra.mxu0 0
      %1529 = vmatprep.subr.bf16.mxu0 0
      %1530 = vmatpush1.bf16.msra.mxu0 0
      %1531 = vmatprep.subr.bf16.mxu0 0
      %1532 = vmatpush1.bf16.msra.mxu0 0
      %1533 = vmatprep.subr.bf16.mxu0 0
      %1534 = vmatpush1.bf16.msra.mxu0 0
      %1535 = vmatprep.subr.bf16.mxu0 0
      %1536 = vmatpush1.bf16.msra.mxu0 0
      %1537 = vmatprep.subr.bf16.mxu0 0
      %1538 = vmatpush1.bf16.msra.mxu0 0
      %1539 = vmatprep.subr.bf16.mxu0 0
      %1540 = vmatpush1.bf16.msra.mxu0 0
      %1541 = vmatprep.subr.bf16.mxu0 0
      %1542 = vmatpush1.bf16.msra.mxu0 0
      %1543 = vmatprep.subr.bf16.mxu0 0
      %1544 = vmatpush1.bf16.msra.mxu0 0
      %1545 = vmatprep.subr.bf16.mxu0 0
      %1546 = vmatpush1.bf16.msra.mxu0 0
      %1547 = vmatprep.subr.bf16.mxu0 0
      %1548 = vmatpush1.bf16.msra.mxu0 0
      %1549 = vmatprep.mubr.bf16.mxu0 0
      %1550 = vmatmul.mubr.bf16.gmra.mrb[0].mxu0 %v1422
      %v1551 = vpop.f32.mrb[0].mxu0
      %v1552 = vadd.f32 %v1406, %v1551
      %v1553 = vpop.f32.mrb[0].mxu0
      %v1554 = vpop.f32.mrb[0].mxu0
      %v1555 = vadd.f32 %v1406, %v1554
      %v1556 = vpop.f32.mrb[0].mxu0
      %1557 = vmatprep.mubr.bf16.mxu0 0
      %1558 = vmatmul.mubr.bf16.gmra.mrb[0].mxu0 %v1425
      %v1559 = vpop.f32.mrb[0].mxu0
      %v1560 = vadd.f32 %v1406, %v1559
      %v1561 = vpop.f32.mrb[0].mxu0
      %v1562 = vpop.f32.mrb[0].mxu0
      %v1563 = vadd.f32 %v1406, %v1562
      %v1564 = vpop.f32.mrb[0].mxu0
      %1565 = vmatprep.mubr.bf16.mxu0 0
      %1566 = vmatmul.mubr.bf16.gmra.mrb[0].mxu0 %v1428
      %v1567 = vpop.f32.mrb[0].mxu0
      %v1568 = vadd.f32 %v1406, %v1567
      %v1569 = vpop.f32.mrb[0].mxu0
      %v1570 = vpop.f32.mrb[0].mxu0
      %v1571 = vadd.f32 %v1406, %v1570
      %v1572 = vpop.f32.mrb[0].mxu0
      %1573 = vmatprep.mubr.bf16.mxu0 0
      %1574 = vmatmul.mubr.bf16.gmra.mrb[0].mxu0 %v1431
      %v1575 = vpop.f32.mrb[0].mxu0
      %v1576 = vadd.f32 %v1406, %v1575
      %v1577 = vpop.f32.mrb[0].mxu0
      %v1578 = vpop.f32.mrb[0].mxu0
      %v1579 = vadd.f32 %v1406, %v1578
      %v1580 = vpop.f32.mrb[0].mxu0
      %1581 = vmatprep.mubr.bf16.mxu0 0
      %1582 = vmatmul.mubr.bf16.gmra.mrb[0].mxu0 %v1434
      %v1583 = vpop.f32.mrb[0].mxu0
      %v1584 = vadd.f32 %v1406, %v1583
      %v1585 = vpop.f32.mrb[0].mxu0
      %v1586 = vpop.f32.mrb[0].mxu0
      %v1587 = vadd.f32 %v1406, %v1586
      %v1588 = vpop.f32.mrb[0].mxu0
      %1589 = vmatprep.mubr.bf16.mxu0 0
      %1590 = vmatmul.mubr.bf16.gmra.mrb[0].mxu0 %v1437
      %v1591 = vpop.f32.mrb[0].mxu0
      %v1592 = vadd.f32 %v1406, %v1591
      %v1593 = vpop.f32.mrb[0].mxu0
      %v1594 = vpop.f32.mrb[0].mxu0
      %v1595 = vadd.f32 %v1406, %v1594
      %v1596 = vpop.f32.mrb[0].mxu0
      %1597 = vmatprep.mubr.bf16.mxu0 0
      %1598 = vmatmul.mubr.bf16.gmra.mrb[0].mxu0 %v1440
      %v1599 = vpop.f32.mrb[0].mxu0
      %v1600 = vadd.f32 %v1406, %v1599
      %v1601 = vpop.f32.mrb[0].mxu0
      %v1602 = vpop.f32.mrb[0].mxu0
      %v1603 = vadd.f32 %v1406, %v1602
      %v1604 = vpop.f32.mrb[0].mxu0
      %1605 = vmatprep.mubr.bf16.mxu0 0
      %1606 = vmatmul.mubr.bf16.gmra.mrb[0].mxu0 %v1443
      %v1607 = vpop.f32.mrb[0].mxu0
      %v1608 = vadd.f32 %v1406, %v1607
      %v1609 = vpop.f32.mrb[0].mxu0
      %v1610 = vpop.f32.mrb[0].mxu0
      %v1611 = vadd.f32 %v1406, %v1610
      %v1612 = vpop.f32.mrb[0].mxu0
      %1613 = vmatprep.mubr.bf16.mxu0 0
      %1614 = vmatmul.mubr.bf16.gmra.mrb[0].mxu0 %v1446
      %v1615 = vpop.f32.mrb[0].mxu0
      %v1616 = vadd.f32 %v1406, %v1615
      %v1617 = vpop.f32.mrb[0].mxu0
      %v1618 = vpop.f32.mrb[0].mxu0
      %v1619 = vadd.f32 %v1406, %v1618
      %v1620 = vpop.f32.mrb[0].mxu0
      %1621 = vmatprep.mubr.bf16.mxu0 0
      %1622 = vmatmul.mubr.bf16.gmra.mrb[0].mxu0 %v1449
      %v1623 = vpop.f32.mrb[0].mxu0
      %v1624 = vadd.f32 %v1406, %v1623
      %v1625 = vpop.f32.mrb[0].mxu0
      %v1626 = vpop.f32.mrb[0].mxu0
      %v1627 = vadd.f32 %v1406, %v1626
      %v1628 = vpop.f32.mrb[0].mxu0
      %1629 = vmatprep.mubr.bf16.mxu0 0
      %1630 = vmatmul.mubr.bf16.gmra.mrb[0].mxu0 %v1452
      %v1631 = vpop.f32.mrb[0].mxu0
      %v1632 = vadd.f32 %v1406, %v1631
      %v1633 = vpop.f32.mrb[0].mxu0
      %v1634 = vpop.f32.mrb[0].mxu0
      %v1635 = vadd.f32 %v1406, %v1634
      %v1636 = vpop.f32.mrb[0].mxu0
      %1637 = vmatprep.mubr.bf16.mxu0 0
      %1638 = vmatmul.mubr.bf16.gmra.mrb[0].mxu0 %v1455
      %v1639 = vpop.f32.mrb[0].mxu0
      %v1640 = vadd.f32 %v1406, %v1639
      %v1641 = vpop.f32.mrb[0].mxu0
      %v1642 = vpop.f32.mrb[0].mxu0
      %v1643 = vadd.f32 %v1406, %v1642
      %v1644 = vpop.f32.mrb[0].mxu0
      %1645 = vmatprep.mubr.bf16.mxu0 0
      %1646 = vmatmul.mubr.bf16.gmra.mrb[0].mxu0 %v1458
      %v1647 = vpop.f32.mrb[0].mxu0
      %v1648 = vadd.f32 %v1406, %v1647
      %v1649 = vpop.f32.mrb[0].mxu0
      %v1650 = vpop.f32.mrb[0].mxu0
      %v1651 = vadd.f32 %v1406, %v1650
      %v1652 = vpop.f32.mrb[0].mxu0
      %1653 = vmatprep.mubr.bf16.mxu0 0
      %1654 = vmatmul.mubr.bf16.gmra.mrb[0].mxu0 %v1461
      %v1655 = vpop.f32.mrb[0].mxu0
      %v1656 = vadd.f32 %v1406, %v1655
      %v1657 = vpop.f32.mrb[0].mxu0
      %v1658 = vpop.f32.mrb[0].mxu0
      %v1659 = vadd.f32 %v1406, %v1658
      %v1660 = vpop.f32.mrb[0].mxu0
      %1661 = vmatprep.mubr.bf16.mxu0 0
      %1662 = vmatmul.mubr.bf16.gmra.mrb[0].mxu0 %v1464
      %v1663 = vpop.f32.mrb[0].mxu0
      %v1664 = vadd.f32 %v1406, %v1663
      %v1665 = vpop.f32.mrb[0].mxu0
      %v1666 = vpop.f32.mrb[0].mxu0
      %v1667 = vadd.f32 %v1406, %v1666
      %v1668 = vpop.f32.mrb[0].mxu0
      %1669 = vmatprep.mubr.bf16.mxu0 0
      %1670 = vmatmul.mubr.bf16.gmra.mrb[0].mxu0 %v1467
      %v1671 = vpop.f32.mrb[0].mxu0
      %v1672 = vadd.f32 %v1406, %v1671
      %v1673 = vpop.f32.mrb[0].mxu0
      %v1674 = vpop.f32.mrb[0].mxu0
      %v1675 = vadd.f32 %v1406, %v1674
      %v1676 = vpop.f32.mrb[0].mxu0
      %1677 = vmatprep.mubr.bf16.mxu0 0
      %1678 = vmatmul.mubr.bf16.gmra.mrb[0].mxu0 %v1470
      %v1679 = vpop.f32.mrb[0].mxu0
      %v1680 = vadd.f32 %v1406, %v1679
      %v1681 = vpop.f32.mrb[0].mxu0
      %v1682 = vpop.f32.mrb[0].mxu0
      %v1683 = vadd.f32 %v1406, %v1682
      %v1684 = vpop.f32.mrb[0].mxu0
      %1685 = vmatprep.mubr.bf16.mxu0 0
      %1686 = vmatmul.mubr.bf16.gmra.mrb[0].mxu0 %v1473
      %v1687 = vpop.f32.mrb[0].mxu0
      %v1688 = vadd.f32 %v1406, %v1687
      %v1689 = vpop.f32.mrb[0].mxu0
      %v1690 = vpop.f32.mrb[0].mxu0
      %v1691 = vadd.f32 %v1406, %v1690
      %v1692 = vpop.f32.mrb[0].mxu0
      %1693 = vmatprep.mubr.bf16.mxu0 0
      %1694 = vmatmul.mubr.bf16.gmra.mrb[0].mxu0 %v1476
      %v1695 = vpop.f32.mrb[0].mxu0
      %v1696 = vadd.f32 %v1406, %v1695
      %v1697 = vpop.f32.mrb[0].mxu0
      %v1698 = vpop.f32.mrb[0].mxu0
      %v1699 = vadd.f32 %v1406, %v1698
      %v1700 = vpop.f32.mrb[0].mxu0
      %1701 = vmatprep.mubr.bf16.mxu0 0
      %1702 = vmatmul.mubr.bf16.gmra.mrb[0].mxu0 %v1479
      %v1703 = vpop.f32.mrb[0].mxu0
      %v1704 = vadd.f32 %v1406, %v1703
      %v1705 = vpop.f32.mrb[0].mxu0
      %v1706 = vpop.f32.mrb[0].mxu0
      %v1707 = vadd.f32 %v1406, %v1706
      %v1708 = vpop.f32.mrb[0].mxu0
      %1709 = vmatprep.mubr.bf16.mxu0 0
      %1710 = vmatmul.mubr.bf16.gmra.mrb[0].mxu0 %v1482
      %v1711 = vpop.f32.mrb[0].mxu0
      %v1712 = vadd.f32 %v1406, %v1711
      %v1713 = vpop.f32.mrb[0].mxu0
      %v1714 = vpop.f32.mrb[0].mxu0
      %v1715 = vadd.f32 %v1406, %v1714
      %v1716 = vpop.f32.mrb[0].mxu0
      %1717 = vmatprep.mubr.bf16.mxu0 0
      %1718 = vmatmul.mubr.bf16.gmra.mrb[0].mxu0 %v1485
      %v1719 = vpop.f32.mrb[0].mxu0
      %v1720 = vadd.f32 %v1406, %v1719
      %v1721 = vpop.f32.mrb[0].mxu0
      %v1722 = vpop.f32.mrb[0].mxu0
      %v1723 = vadd.f32 %v1406, %v1722
      %v1724 = vpop.f32.mrb[0].mxu0
      %1725 = vmatprep.mubr.bf16.mxu0 0
      %1726 = vmatmul.mubr.bf16.gmra.mrb[0].mxu0 %v1488
      %v1727 = vpop.f32.mrb[0].mxu0
      %v1728 = vadd.f32 %v1406, %v1727
      %v1729 = vpop.f32.mrb[0].mxu0
      %v1730 = vpop.f32.mrb[0].mxu0
      %v1731 = vadd.f32 %v1406, %v1730
      %v1732 = vpop.f32.mrb[0].mxu0
      %1733 = vmatprep.mubr.bf16.mxu0 0
      %1734 = vmatmul.mubr.bf16.gmra.mrb[0].mxu0 %v1491
      %v1735 = vpop.f32.mrb[0].mxu0
      %v1736 = vadd.f32 %v1406, %v1735
      %v1737 = vpop.f32.mrb[0].mxu0
      %v1738 = vpop.f32.mrb[0].mxu0
      %v1739 = vadd.f32 %v1406, %v1738
      %v1740 = vpop.f32.mrb[0].mxu0
      %1741 = vmatprep.mubr.bf16.mxu0 0
      %1742 = vmatmul.mubr.bf16.gmra.mrb[0].mxu0 %v1494
      %v1743 = vpop.f32.mrb[0].mxu0
      %v1744 = vadd.f32 %v1406, %v1743
      %v1745 = vpop.f32.mrb[0].mxu0
      %v1746 = vpop.f32.mrb[0].mxu0
      %v1747 = vadd.f32 %v1406, %v1746
      %v1748 = vpop.f32.mrb[0].mxu0
      %1749 = vmatprep.mubr.bf16.mxu0 0
      %1750 = vmatmul.mubr.bf16.gmra.mrb[0].mxu0 %v1497
      %v1751 = vpop.f32.mrb[0].mxu0
      %v1752 = vadd.f32 %v1406, %v1751
      %v1753 = vpop.f32.mrb[0].mxu0
      %v1754 = vpop.f32.mrb[0].mxu0
      %v1755 = vadd.f32 %v1406, %v1754
      %v1756 = vpop.f32.mrb[0].mxu0
      %1757 = vmatprep.mubr.bf16.mxu0 0
      %1758 = vmatmul.mubr.bf16.gmra.mrb[0].mxu0 %v1500
      %v1759 = vpop.f32.mrb[0].mxu0
      %v1760 = vadd.f32 %v1406, %v1759
      %v1761 = vpop.f32.mrb[0].mxu0
      %v1762 = vpop.f32.mrb[0].mxu0
      %v1763 = vadd.f32 %v1406, %v1762
      %v1764 = vpop.f32.mrb[0].mxu0
      %1765 = vmatprep.mubr.bf16.mxu0 0
      %1766 = vmatmul.mubr.bf16.gmra.mrb[0].mxu0 %v1503
      %v1767 = vpop.f32.mrb[0].mxu0
      %v1768 = vadd.f32 %v1406, %v1767
      %v1769 = vpop.f32.mrb[0].mxu0
      %v1770 = vpop.f32.mrb[0].mxu0
      %v1771 = vadd.f32 %v1406, %v1770
      %v1772 = vpop.f32.mrb[0].mxu0
      %1773 = vmatprep.mubr.bf16.mxu0 0
      %1774 = vmatmul.mubr.bf16.gmra.mrb[0].mxu0 %v1506
      %v1775 = vpop.f32.mrb[0].mxu0
      %v1776 = vadd.f32 %v1406, %v1775
      %v1777 = vpop.f32.mrb[0].mxu0
      %v1778 = vpop.f32.mrb[0].mxu0
      %v1779 = vadd.f32 %v1406, %v1778
      %v1780 = vpop.f32.mrb[0].mxu0
      %1781 = vmatprep.mubr.bf16.mxu0 0
      %1782 = vmatmul.mubr.bf16.gmra.mrb[0].mxu0 %v1509
      %v1783 = vpop.f32.mrb[0].mxu0
      %v1784 = vadd.f32 %v1406, %v1783
      %v1785 = vpop.f32.mrb[0].mxu0
      %v1786 = vpop.f32.mrb[0].mxu0
      %v1787 = vadd.f32 %v1406, %v1786
      %v1788 = vpop.f32.mrb[0].mxu0
      %1789 = vmatprep.mubr.bf16.mxu0 0
      %1790 = vmatmul.mubr.bf16.gmra.mrb[0].mxu0 %v1512
      %v1791 = vpop.f32.mrb[0].mxu0
      %v1792 = vadd.f32 %v1406, %v1791
      %v1793 = vpop.f32.mrb[0].mxu0
      %v1794 = vpop.f32.mrb[0].mxu0
      %v1795 = vadd.f32 %v1406, %v1794
      %v1796 = vpop.f32.mrb[0].mxu0
      %1797 = vmatprep.mubr.bf16.mxu0 0
      %1798 = vmatmul.mubr.bf16.gmra.mrb[0].mxu0 %v1515
      %v1799 = vpop.f32.mrb[0].mxu0
      %v1800 = vadd.f32 %v1406, %v1799
      %v1801 = vpop.f32.mrb[0].mxu0
      %v1802 = vpop.f32.mrb[0].mxu0
      %v1803 = vadd.f32 %v1406, %v1802
      %v1804 = vpop.f32.mrb[0].mxu0
      %1805 = vdwg.mxu0
      %vm1806 = vcmask 64512
      %1807 = vst.msk [vmem:[%s280] sm:$0xff] %vm1806, %v1552
      %1808 = vst.msk [vmem:[%s280 + $0x8] sm:$0xff] %vm1806, %v1555
      %1809 = vst.msk [vmem:[%s280 + $0x10] sm:$0xff] %vm1806, %v1560
      %1810 = vst.msk [vmem:[%s280 + $0x18] sm:$0xff] %vm1806, %v1563
      %1811 = vst.msk [vmem:[%s280 + $0x20] sm:$0xff] %vm1806, %v1568
      %1812 = vst.msk [vmem:[%s280 + $0x28] sm:$0xff] %vm1806, %v1571
      %1813 = vst.msk [vmem:[%s280 + $0x30] sm:$0xff] %vm1806, %v1576
      %1814 = vst.msk [vmem:[%s280 + $0x38] sm:$0xff] %vm1806, %v1579
      %1815 = vst.msk [vmem:[%s280 + $0x40] sm:$0xff] %vm1806, %v1584
      %1816 = vst.msk [vmem:[%s280 + $0x48] sm:$0xff] %vm1806, %v1587
      %1817 = vst.msk [vmem:[%s280 + $0x50] sm:$0xff] %vm1806, %v1592
      %1818 = vst.msk [vmem:[%s280 + $0x58] sm:$0xff] %vm1806, %v1595
      %1819 = vst.msk [vmem:[%s280 + $0x60] sm:$0xff] %vm1806, %v1600
      %1820 = vst.msk [vmem:[%s280 + $0x68] sm:$0xff] %vm1806, %v1603
      %1821 = vst.msk [vmem:[%s280 + $0x70] sm:$0xff] %vm1806, %v1608
      %1822 = vst.msk [vmem:[%s280 + $0x78] sm:$0xff] %vm1806, %v1611
      %1823 = vst.msk [vmem:[%s280 + $0x80] sm:$0xff] %vm1806, %v1616
      %1824 = vst.msk [vmem:[%s280 + $0x88] sm:$0xff] %vm1806, %v1619
      %1825 = vst.msk [vmem:[%s280 + $0x90] sm:$0xff] %vm1806, %v1624
      %1826 = vst.msk [vmem:[%s280 + $0x98] sm:$0xff] %vm1806, %v1627
      %1827 = vst.msk [vmem:[%s280 + $0xa0] sm:$0xff] %vm1806, %v1632
      %1828 = vst.msk [vmem:[%s280 + $0xa8] sm:$0xff] %vm1806, %v1635
      %1829 = vst.msk [vmem:[%s280 + $0xb0] sm:$0xff] %vm1806, %v1640
      %1830 = vst.msk [vmem:[%s280 + $0xb8] sm:$0xff] %vm1806, %v1643
      %1831 = vst.msk [vmem:[%s280 + $0xc0] sm:$0xff] %vm1806, %v1648
      %1832 = vst.msk [vmem:[%s280 + $0xc8] sm:$0xff] %vm1806, %v1651
      %1833 = vst.msk [vmem:[%s280 + $0xd0] sm:$0xff] %vm1806, %v1656
      %1834 = vst.msk [vmem:[%s280 + $0xd8] sm:$0xff] %vm1806, %v1659
      %1835 = vst.msk [vmem:[%s280 + $0xe0] sm:$0xff] %vm1806, %v1664
      %1836 = vst.msk [vmem:[%s280 + $0xe8] sm:$0xff] %vm1806, %v1667
      %1837 = vst.msk [vmem:[%s280 + $0xf0] sm:$0xff] %vm1806, %v1672
      %1838 = vst.msk [vmem:[%s280 + $0xf8] sm:$0xff] %vm1806, %v1675
      %1839 = vst.msk [vmem:[%s280 + $0x100] sm:$0xff] %vm1806, %v1680
      %1840 = vst.msk [vmem:[%s280 + $0x108] sm:$0xff] %vm1806, %v1683
      %1841 = vst.msk [vmem:[%s280 + $0x110] sm:$0xff] %vm1806, %v1688
      %1842 = vst.msk [vmem:[%s280 + $0x118] sm:$0xff] %vm1806, %v1691
      %1843 = vst.msk [vmem:[%s280 + $0x120] sm:$0xff] %vm1806, %v1696
      %1844 = vst.msk [vmem:[%s280 + $0x128] sm:$0xff] %vm1806, %v1699
      %1845 = vst.msk [vmem:[%s280 + $0x130] sm:$0xff] %vm1806, %v1704
      %1846 = vst.msk [vmem:[%s280 + $0x138] sm:$0xff] %vm1806, %v1707
      %1847 = vst.msk [vmem:[%s280 + $0x140] sm:$0xff] %vm1806, %v1712
      %1848 = vst.msk [vmem:[%s280 + $0x148] sm:$0xff] %vm1806, %v1715
      %1849 = vst.msk [vmem:[%s280 + $0x150] sm:$0xff] %vm1806, %v1720
      %1850 = vst.msk [vmem:[%s280 + $0x158] sm:$0xff] %vm1806, %v1723
      %1851 = vst.msk [vmem:[%s280 + $0x160] sm:$0xff] %vm1806, %v1728
      %1852 = vst.msk [vmem:[%s280 + $0x168] sm:$0xff] %vm1806, %v1731
      %1853 = vst.msk [vmem:[%s280 + $0x170] sm:$0xff] %vm1806, %v1736
      %1854 = vst.msk [vmem:[%s280 + $0x178] sm:$0xff] %vm1806, %v1739
      %1855 = vst.msk [vmem:[%s280 + $0x180] sm:$0xff] %vm1806, %v1744
      %1856 = vst.msk [vmem:[%s280 + $0x188] sm:$0xff] %vm1806, %v1747
      %1857 = vst.msk [vmem:[%s280 + $0x190] sm:$0xff] %vm1806, %v1752
      %1858 = vst.msk [vmem:[%s280 + $0x198] sm:$0xff] %vm1806, %v1755
      %1859 = vst.msk [vmem:[%s280 + $0x1a0] sm:$0xff] %vm1806, %v1760
      %1860 = vst.msk [vmem:[%s280 + $0x1a8] sm:$0xff] %vm1806, %v1763
      %1861 = vst.msk [vmem:[%s280 + $0x1b0] sm:$0xff] %vm1806, %v1768
      %1862 = vst.msk [vmem:[%s280 + $0x1b8] sm:$0xff] %vm1806, %v1771
      %1863 = vst.msk [vmem:[%s280 + $0x1c0] sm:$0xff] %vm1806, %v1776
      %1864 = vst.msk [vmem:[%s280 + $0x1c8] sm:$0xff] %vm1806, %v1779
      %1865 = vst.msk [vmem:[%s280 + $0x1d0] sm:$0xff] %vm1806, %v1784
      %1866 = vst.msk [vmem:[%s280 + $0x1d8] sm:$0xff] %vm1806, %v1787
      %1867 = vst.msk [vmem:[%s280 + $0x1e0] sm:$0xff] %vm1806, %v1792
      %1868 = vst.msk [vmem:[%s280 + $0x1e8] sm:$0xff] %vm1806, %v1795
      %1869 = vst.msk [vmem:[%s280 + $0x1f0] sm:$0xff] %vm1806, %v1800
      %1870 = vst.msk [vmem:[%s280 + $0x1f8] sm:$0xff] %vm1806, %v1803
      %s1871 = smul.u32 64, %s18
      %p1872 = scmp.lt.s32.totalorder %s1871, 127
      %s1873 = scalar_select %p1872, %s1871, 127
      %s1874 = smul.addr %s1873, 8
      %s1875 = scalar_lea.vmem %s7, %s1874
      // Predicated region
      $region49: #{tpu_custom_call.1} parent=47 // pred_check
        %p1876 = pneg %p188
      $region50: #{tpu_custom_call.1} parent=47 // pred_check_branch
        %1878 = sbr.rel (%p1876) target = $region52
      $region51: #{tpu_custom_call.1} parent=47 // pred_region
        %s1879 = smul.u32 64, %s18
      $region52: #{tpu_custom_call.1} parent=47 // pred_fallthru
        _
    $region48: #{tpu_custom_call.1} parent=5 // pred_fallthru
      _
    %p1880 = scmp.le.s32.totalorder 2, %s13
    // Predicated region
    $region53: #{tpu_custom_call.1} parent=5 // pred_check
      %p1881 = pneg %p1880
    $region54: #{tpu_custom_call.1} parent=5 // pred_check_branch
      %1883 = sbr.rel (%p1881) target = $region56
    $region55: #{tpu_custom_call.1} parent=5 // pred_region
      %s1884 = ssub.s32 %s13, 2
      // Predicated region
      $region57: #{tpu_custom_call.1} parent=55 // pred_check
        %p1885 = pneg %p194
      $region58: #{tpu_custom_call.1} parent=55 // pred_check_branch
        %1887 = sbr.rel (%p1885) target = $region60
      $region59: #{tpu_custom_call.1} parent=55 // pred_region
        %s1888 = smul.u32 64, %s19
        %p1889 = scmp.lt.s32.totalorder %s1888, 127
        %s1890 = scalar_select %p1889, %s1888, 127
        %s1891 = smul.addr %s1890, 8
        %s1892 = scalar_lea.vmem %s7, %s1891
      $region60: #{tpu_custom_call.1} parent=55 // pred_fallthru
        _
    $region56: #{tpu_custom_call.1} parent=5 // pred_fallthru
      _
  $region6: #{tpu_custom_call.1} parent=0 // loop_footer
    %s17 = sadd.s32 1, %s13
  $region7: #{tpu_custom_call.1} parent=0 // loop_footer_branch
    %12 = sbr.rel target = $region3
  $region8: #{tpu_custom_call.1} parent=0 // loop_exit
    _

</llo_original>
